<compile_context>
chip_gen: v7x
topology: tpu7x:2x2x1
jax: 0.10.0
libtpu: 0.0.40
codegen_flags: <defaults>
</compile_context>

<pallas_src>
import functools

import jax
import jax.numpy as jnp
from jax import lax
from jax.experimental import pallas as pl
from jax.experimental.pallas import tpu as pltpu


def _rows_per_chunk(th, w, target_m=512):
    """Largest divisor of th whose chunk matmul M (= rows*w) stays near target."""
    for c in range(th, 0, -1):
        if th % c == 0 and c * w <= target_m:
            return c
    return 1


# ---------------------------------------------------------------------------
# Kernel: one (batch, row-tile) step of the fused bottleneck.
# ---------------------------------------------------------------------------
def bottleneck_kernel(x_ref, xtop_ref, xbot_ref,
                      w1_ref, s1_ref, b1_ref,
                      w2_ref, s2_ref, b2_ref,
                      w3_ref, s3_ref, b3_ref,
                      out_ref, h1pad_ref):
    _, TH, W, Cin = x_ref.shape
    width = w1_ref.shape[1]
    Cout = w3_ref.shape[1]

    r = pl.program_id(1)
    num_r = pl.num_programs(1)

    w1 = w1_ref[...]                      # (Cin, width) bf16
    s1 = s1_ref[...]                      # (1, width)   f32
    b1 = b1_ref[...]

    def conv1_bn_relu(x2d):               # (M, Cin) bf16 -> (M, width) bf16
        h = jnp.dot(x2d, w1, preferred_element_type=jnp.float32)
        return jnp.maximum(h * s1 + b1, 0.0).astype(jnp.bfloat16)

    # ---- zero the left/right padding columns of the conv2 input scratch -----
    zcol = jnp.zeros((TH + 2, 1, width), jnp.bfloat16)
    h1pad_ref[:, 0:1, :] = zcol
    h1pad_ref[:, W + 1:W + 2, :] = zcol

    ch = _rows_per_chunk(TH, W)           # static; divides TH
    n_chunks = TH // ch

    # ---- conv1 + bn1 + relu1 on the body rows, chunked, written in place ----
    for c in range(n_chunks):             # static unroll (== fori_loop(unroll=True))
        row0 = c * ch
        xc = x_ref[0, row0:row0 + ch].reshape(ch * W, Cin)
        h1 = conv1_bn_relu(xc).reshape(ch, W, width)
        h1pad_ref[row0 + 1:row0 + ch + 1, 1:W + 1, :] = h1

    # ---- halo rows: conv1 of the neighbouring row, or zero at image edges ---
    # (zero-padding applies to relu(bn1(conv1 x)) — the conv2 input — not to x)
    zrow = jnp.zeros((1, W, width), jnp.bfloat16)

    @pl.when(r > 0)
    def _():
        h1pad_ref[0:1, 1:W + 1, :] = conv1_bn_relu(xtop_ref[0, 0]).reshape(1, W, width)

    @pl.when(r == 0)
    def _():
        h1pad_ref[0:1, 1:W + 1, :] = zrow

    @pl.when(r < num_r - 1)
    def _():
        h1pad_ref[TH + 1:TH + 2, 1:W + 1, :] = conv1_bn_relu(xbot_ref[0, 0]).reshape(1, W, width)

    @pl.when(r == num_r - 1)
    def _():
        h1pad_ref[TH + 1:TH + 2, 1:W + 1, :] = zrow

    # ---- conv2 (3x3) + bn2 + relu2 + conv3 + bn3 + residual + relu3 ---------
    s2 = s2_ref[...]
    b2 = b2_ref[...]
    w3 = w3_ref[...]
    s3 = s3_ref[...]
    b3 = b3_ref[...]

    for c in range(n_chunks):
        row0 = c * ch
        acc = jnp.zeros((ch * W, width), jnp.float32)
        for dy in range(3):
            # dx taps sliced straight from the scratch ref, concatenated along
            # the channel (lane) axis -> one K = 3*width matmul per dy.
            taps = [h1pad_ref[row0 + dy:row0 + dy + ch, dx:dx + W, :]
                    for dx in range(3)]
            patch = jnp.concatenate(taps, axis=-1).reshape(ch * W, 3 * width)
            acc = acc + jnp.dot(patch, w2_ref[dy],
                                preferred_element_type=jnp.float32)
        h2 = jnp.maximum(acc * s2 + b2, 0.0).astype(jnp.bfloat16)

        h3 = jnp.dot(h2, w3, preferred_element_type=jnp.float32) * s3 + b3
        # residual re-read from the VMEM ref (not kept live across the kernel)
        resid = x_ref[0, row0:row0 + ch].reshape(ch * W, Cin).astype(jnp.float32)
        out = jnp.maximum(h3 + resid, 0.0)
        out_ref[0, row0:row0 + ch] = out.reshape(ch, W, Cout).astype(out_ref.dtype)


# ---------------------------------------------------------------------------
# Wrapper: layout conversion, BN folding, pallas_call plumbing.
# ---------------------------------------------------------------------------
def _fold_bn(gamma, beta, mean, var, eps=1e-5):
    scale = gamma / jnp.sqrt(var + eps)
    bias = beta - mean * scale
    return (scale.reshape(1, -1).astype(jnp.float32),
            bias.reshape(1, -1).astype(jnp.float32))


@functools.partial(jax.jit, static_argnames=("block_h",))
def bottleneck_pallas(x_nchw, params, block_h=32):
    N, Cin, H, W = x_nchw.shape
    width = params["w1"].shape[0]
    Cout = params["w3"].shape[0]
    if Cout != Cin:
        raise ValueError("identity residual requires inplanes == planes*expansion")

    # Row tile: largest divisor of H that is <= block_h; guard the degenerate
    # tiny-tile case (e.g. prime H) by falling back to a whole-image tile.
    # TODO(synk): ragged last tile (cdiv grid + masking) for very large prime H.
    th = 1
    for d in range(1, min(block_h, H) + 1):
        if H % d == 0:
            th = d
    if th * 4 <= min(block_h, H):
        th = H
    num_r = H // th

    # NCHW -> NHWC with the bf16 cast fused into the transpose.
    # TODO(synk): keep activations NHWC bf16 end-to-end across the network so
    #             these wrapper-side transposes disappear entirely.
    x = jnp.transpose(x_nchw.astype(jnp.bfloat16), (0, 2, 3, 1))

    # PyTorch conv weights -> channels-last bf16 contraction matrices.
    w1m = jnp.transpose(params["w1"][:, :, 0, 0], (1, 0)).astype(jnp.bfloat16)   # (Cin, width)
    # (out,in,3,3) -> (dy, dx*in, out): per-dy grouped K = 3*width contraction
    w2m = (jnp.transpose(params["w2"], (2, 3, 1, 0))
           .reshape(3, 3 * width, width).astype(jnp.bfloat16))
    w3m = jnp.transpose(params["w3"][:, :, 0, 0], (1, 0)).astype(jnp.bfloat16)   # (width, Cout)

    s1, b1 = _fold_bn(*params["bn1"])
    s2, b2 = _fold_bn(*params["bn2"])
    s3, b3 = _fold_bn(*params["bn3"])

    full = lambda shape: pl.BlockSpec(shape, lambda n, r: (0,) * len(shape))

    # Scoped-VMEM budget from the actual tile footprint, clamped per chip
    # generation (v7x has only 64 MiB per TensorCore).
    tile_bytes = (
        2 * (th * W * Cin * 2 + 2 * W * Cin * 2 + th * W * Cout * 2)   # bf16 x/halos/out (double-buffered)
        + (Cin * width + 9 * width * width + width * Cout) * 2         # bf16 weights
        + 6 * max(width, Cout) * 4                                     # folded BN scale/bias
        + (th + 2) * (W + 2) * width * 2                               # bf16 padded conv1 scratch
    )
    try:
        vmem_cap = int(pltpu.get_tpu_info().vmem_capacity_bytes)
    except Exception:
        vmem_cap = 64 * 1024 * 1024
    vmem_limit = int(min(int(0.75 * vmem_cap),
                         max(32 * 1024 * 1024, 8 * tile_bytes)))

    out_nhwc = pl.pallas_call(
        bottleneck_kernel,
        out_shape=jax.ShapeDtypeStruct((N, H, W, Cout), jnp.bfloat16),
        grid_spec=pltpu.PrefetchScalarGridSpec(
            num_scalar_prefetch=0,
            grid=(N, num_r),
            in_specs=[
                # body rows of x (bf16)
                pl.BlockSpec((1, th, W, Cin), lambda n, r: (n, r, 0, 0)),
                # single-row top/bottom halos (index clamped at the image edge;
                # the clamped row is unused — padding handled in-kernel)
                pl.BlockSpec((1, 1, W, Cin),
                             lambda n, r: (n, jnp.maximum(r * th - 1, 0), 0, 0)),
                pl.BlockSpec((1, 1, W, Cin),
                             lambda n, r: (n, jnp.minimum((r + 1) * th, H - 1), 0, 0)),
                full((Cin, width)),                                     # w1
                full((1, width)), full((1, width)),                     # bn1 scale/bias
                full((3, 3 * width, width)),                            # w2 grouped taps
                full((1, width)), full((1, width)),                     # bn2 scale/bias
                full((width, Cout)),                                    # w3
                full((1, Cout)), full((1, Cout)),                       # bn3 scale/bias
            ],
            out_specs=pl.BlockSpec((1, th, W, Cout), lambda n, r: (n, r, 0, 0)),
            scratch_shapes=[pltpu.VMEM((th + 2, W + 2, width), jnp.bfloat16)],
        ),
        compiler_params=pltpu.CompilerParams(
            dimension_semantics=("parallel", "parallel"),
            vmem_limit_bytes=vmem_limit),
    )(x, x, x, w1m, s1, b1, w2m, s2, b2, w3m, s3, b3)

    # back to NCHW f32 to match the PyTorch module interface
    return jnp.transpose(out_nhwc, (0, 3, 1, 2)).astype(jnp.float32)


# ---------------------------------------------------------------------------
# Pure-JAX reference (NCHW, eval-mode BN) with matching bf16 matmul operands.
# ---------------------------------------------------------------------------
def bottleneck_ref(x, params, eps=1e-5):
    dn = ("NCHW", "OIHW", "NCHW")
    bf = jnp.bfloat16

    def conv(y, w, padding):
        return lax.conv_general_dilated(
            y.astype(bf), w.astype(bf), (1, 1), padding,
            dimension_numbers=dn, preferred_element_type=jnp.float32)

    def bn(y, gamma, beta, mean, var):
        c = lambda a: a[None, :, None, None]
        return (y - c(mean)) / jnp.sqrt(c(var) + eps) * c(gamma) + c(beta)

    out = jax.nn.relu(bn(conv(x, params["w1"], "VALID"), *params["bn1"]))
    out = jax.nn.relu(bn(conv(out, params["w2"], ((1, 1), (1, 1))), *params["bn2"]))
    out = bn(conv(out, params["w3"], "VALID"), *params["bn3"])
    return jax.nn.relu(out + x)


# ---------------------------------------------------------------------------
# Deterministic parameters + self-test.
# ---------------------------------------------------------------------------
def make_params(key, inplanes, planes, base_width=64, groups=1, expansion=4):
    width = int(planes * (base_width / 64.0)) * groups
    cout = planes * expansion
    ks = jax.random.split(key, 6)

    def bn_params(k, c):
        k1, k2, k3, k4 = jax.random.split(k, 4)
        gamma = jax.random.uniform(k1, (c,), jnp.float32, 0.5, 1.5)
        beta = 0.1 * jax.random.normal(k2, (c,), jnp.float32)
        mean = 0.1 * jax.random.normal(k3, (c,), jnp.float32)
        var = jax.random.uniform(k4, (c,), jnp.float32, 0.5, 1.5)
        return (gamma, beta, mean, var)

    return {
        "w1": 0.2 * jax.random.normal(ks[0], (width, inplanes, 1, 1), jnp.float32),
        "w2": 0.2 * jax.random.normal(ks[1], (width, width, 3, 3), jnp.float32),
        "w3": 0.2 * jax.random.normal(ks[2], (cout, width, 1, 1), jnp.float32),
        "bn1": bn_params(ks[3], width),
        "bn2": bn_params(ks[4], width),
        "bn3": bn_params(ks[5], cout),
    }


if __name__ == "__main__":
    # small config: batch=2, inplanes=16, planes=4 -> width=4, Cout=16, 8x8 spatial
    # block_h=4 -> 2 row tiles per image, exercising the halo path.
    N, inplanes, planes, H, W = 2, 16, 4, 8, 8
    key = jax.random.PRNGKey(0)
    kx, kp = jax.random.split(key)

    x = jax.random.normal(kx, (N, inplanes, H, W), jnp.float32)
    params = make_params(kp, inplanes, planes)

    out = jax.block_until_ready(bottleneck_pallas(x, params, block_h=4))
    ref = jax.block_until_ready(bottleneck_ref(x, params))

    assert out.shape == ref.shape == (N, planes * 4, H, W)
    max_err = float(jnp.max(jnp.abs(out - ref)))
    assert jnp.allclose(out, ref, rtol=2e-2, atol=2e-2), max_err

    print("KERNEL_OK")
</pallas_src>

<mosaic_0001>
module attributes {stable_mosaic.version = 11 : i64} {
  func.func @bottleneck_kernel(%arg0: i32, %arg1: i32, %arg2: memref<1x4x8x16xbf16, #tpu.memory_space<vmem>>, %arg3: memref<1x1x8x16xbf16, #tpu.memory_space<vmem>>, %arg4: memref<1x1x8x16xbf16, #tpu.memory_space<vmem>>, %arg5: memref<16x4xbf16, #tpu.memory_space<vmem>>, %arg6: memref<1x4xf32, #tpu.memory_space<vmem>>, %arg7: memref<1x4xf32, #tpu.memory_space<vmem>>, %arg8: memref<3x12x4xbf16, #tpu.memory_space<vmem>>, %arg9: memref<1x4xf32, #tpu.memory_space<vmem>>, %arg10: memref<1x4xf32, #tpu.memory_space<vmem>>, %arg11: memref<4x16xbf16, #tpu.memory_space<vmem>>, %arg12: memref<1x16xf32, #tpu.memory_space<vmem>>, %arg13: memref<1x16xf32, #tpu.memory_space<vmem>>, %arg14: memref<1x4x8x16xbf16, #tpu.memory_space<vmem>>, %arg15: memref<6x10x4xbf16, #tpu.memory_space<vmem>>) attributes {dimension_semantics = [#tpu.dimension_semantics<parallel>, #tpu.dimension_semantics<parallel>], iteration_bounds = array<i64: 2, 2>, scalar_prefetch = 0 : i64, scratch_operands = 1 : i64, tpu.core_type = #tpu.core_type<tc>, window_params = [{transform_indices = @transform_0, window_bounds = array<i64: 1, 4, 8, 16>}, {transform_indices = @transform_1, window_bounds = array<i64: 1, 1, 8, 16>}, {transform_indices = @transform_2, window_bounds = array<i64: 1, 1, 8, 16>}, {pipeline_mode = #tpu.pipeline_mode<synchronous>, transform_indices = @transform_3, window_bounds = array<i64: 16, 4>}, {pipeline_mode = #tpu.pipeline_mode<synchronous>, transform_indices = @transform_4, window_bounds = array<i64: 1, 4>}, {pipeline_mode = #tpu.pipeline_mode<synchronous>, transform_indices = @transform_5, window_bounds = array<i64: 1, 4>}, {pipeline_mode = #tpu.pipeline_mode<synchronous>, transform_indices = @transform_6, window_bounds = array<i64: 3, 12, 4>}, {pipeline_mode = #tpu.pipeline_mode<synchronous>, transform_indices = @transform_7, window_bounds = array<i64: 1, 4>}, {pipeline_mode = #tpu.pipeline_mode<synchronous>, transform_indices = @transform_8, window_bounds = array<i64: 1, 4>}, {pipeline_mode = #tpu.pipeline_mode<synchronous>, transform_indices = @transform_9, window_bounds = array<i64: 4, 16>}, {pipeline_mode = #tpu.pipeline_mode<synchronous>, transform_indices = @transform_10, window_bounds = array<i64: 1, 16>}, {pipeline_mode = #tpu.pipeline_mode<synchronous>, transform_indices = @transform_11, window_bounds = array<i64: 1, 16>}, {transform_indices = @transform_12, window_bounds = array<i64: 1, 4, 8, 16>}]} {
    %c0 = arith.constant 0 : index
    %c0_0 = arith.constant 0 : index
    %0 = vector.load %arg5[%c0, %c0_0] : memref<16x4xbf16, #tpu.memory_space<vmem>>, vector<16x4xbf16>
    %c0_1 = arith.constant 0 : index
    %c0_2 = arith.constant 0 : index
    %1 = vector.load %arg6[%c0_1, %c0_2] : memref<1x4xf32, #tpu.memory_space<vmem>>, vector<1x4xf32>
    %c0_3 = arith.constant 0 : index
    %c0_4 = arith.constant 0 : index
    %2 = vector.load %arg7[%c0_3, %c0_4] : memref<1x4xf32, #tpu.memory_space<vmem>>, vector<1x4xf32>
    %cst = arith.constant 0.000000e+00 : bf16
    %3 = vector.broadcast %cst : bf16 to vector<6x1x4xbf16>
    %c0_5 = arith.constant 0 : index
    %c0_6 = arith.constant 0 : index
    %c0_7 = arith.constant 0 : index
    %4 = vector.load %arg15[%c0_5, %c0_6, %c0_7] : memref<6x10x4xbf16, #tpu.memory_space<vmem>>, vector<6x1x4xbf16>
    tpu.vector_store %arg15[%c0_5, %c0_6, %c0_7], %3 {strides = array<i32>} : memref<6x10x4xbf16, #tpu.memory_space<vmem>>, vector<6x1x4xbf16>,
    %c0_8 = arith.constant 0 : index
    %c9 = arith.constant 9 : index
    %c0_9 = arith.constant 0 : index
    %5 = vector.load %arg15[%c0_8, %c9, %c0_9] : memref<6x10x4xbf16, #tpu.memory_space<vmem>>, vector<6x1x4xbf16>
    tpu.vector_store %arg15[%c0_8, %c9, %c0_9], %3 {strides = array<i32>} : memref<6x10x4xbf16, #tpu.memory_space<vmem>>, vector<6x1x4xbf16>,
    %c0_10 = arith.constant 0 : index
    %c0_11 = arith.constant 0 : index
    %c0_12 = arith.constant 0 : index
    %c0_13 = arith.constant 0 : index
    %6 = vector.load %arg2[%c0_10, %c0_11, %c0_12, %c0_13] : memref<1x4x8x16xbf16, #tpu.memory_space<vmem>>, vector<1x4x8x16xbf16>
    %7 = vector.shape_cast %6 : vector<1x4x8x16xbf16> to vector<4x8x16xbf16>
    %8 = vector.shape_cast %7 : vector<4x8x16xbf16> to vector<32x16xbf16>
    %cst_14 = arith.constant dense<0.000000e+00> : vector<32x4xf32>
    %9 = tpu.matmul %8, %0, %cst_14 {dimension_numbers = #tpu.dot_dimension_numbers<[1], [0], [0], [1], [0, 0, 1, 1], [], []>} : vector<32x16xbf16>, vector<16x4xbf16>, vector<32x4xf32> -> vector<32x4xf32>
    %10 = vector.broadcast %1 : vector<1x4xf32> to vector<32x4xf32>
    %11 = arith.mulf %9, %10 : vector<32x4xf32>
    %12 = vector.broadcast %2 : vector<1x4xf32> to vector<32x4xf32>
    %13 = arith.addf %11, %12 : vector<32x4xf32>
    %cst_15 = arith.constant 0.000000e+00 : f32
    %14 = vector.broadcast %cst_15 : f32 to vector<32x4xf32>
    %15 = arith.maximumf %13, %14 : vector<32x4xf32>
    %16 = arith.truncf %15 : vector<32x4xf32> to vector<32x4xbf16>
    %17 = vector.shape_cast %16 : vector<32x4xbf16> to vector<4x8x4xbf16>
    %c1 = arith.constant 1 : index
    %c1_16 = arith.constant 1 : index
    %c0_17 = arith.constant 0 : index
    %18 = vector.load %arg15[%c1, %c1_16, %c0_17] : memref<6x10x4xbf16, #tpu.memory_space<vmem>>, vector<4x8x4xbf16>
    tpu.vector_store %arg15[%c1, %c1_16, %c0_17], %17 {strides = array<i32>} : memref<6x10x4xbf16, #tpu.memory_space<vmem>>, vector<4x8x4xbf16>,
    %cst_18 = arith.constant 0.000000e+00 : bf16
    %19 = vector.broadcast %cst_18 : bf16 to vector<1x8x4xbf16>
    %c0_i32 = arith.constant 0 : i32
    %20 = arith.cmpi sgt, %arg1, %c0_i32 : i32
    %21 = arith.extui %20 : i1 to i32
    %c0_i32_19 = arith.constant 0 : i32
    %22 = arith.cmpi ne, %21, %c0_i32_19 : i32
    scf.if %22 {
      %c0_85 = arith.constant 0 : index
      %c0_86 = arith.constant 0 : index
      %c0_87 = arith.constant 0 : index
      %c0_88 = arith.constant 0 : index
      %89 = vector.load %arg3[%c0_85, %c0_86, %c0_87, %c0_88] : memref<1x1x8x16xbf16, #tpu.memory_space<vmem>>, vector<1x1x8x16xbf16>
      %90 = vector.shape_cast %89 : vector<1x1x8x16xbf16> to vector<8x16xbf16>
      %cst_89 = arith.constant dense<0.000000e+00> : vector<8x4xf32>
      %91 = tpu.matmul %90, %0, %cst_89 {dimension_numbers = #tpu.dot_dimension_numbers<[1], [0], [0], [1], [0, 0, 1, 1], [], []>} : vector<8x16xbf16>, vector<16x4xbf16>, vector<8x4xf32> -> vector<8x4xf32>
      %92 = vector.broadcast %1 : vector<1x4xf32> to vector<8x4xf32>
      %93 = arith.mulf %91, %92 : vector<8x4xf32>
      %94 = vector.broadcast %2 : vector<1x4xf32> to vector<8x4xf32>
      %95 = arith.addf %93, %94 : vector<8x4xf32>
      %cst_90 = arith.constant 0.000000e+00 : f32
      %96 = vector.broadcast %cst_90 : f32 to vector<8x4xf32>
      %97 = arith.maximumf %95, %96 : vector<8x4xf32>
      %98 = arith.truncf %97 : vector<8x4xf32> to vector<8x4xbf16>
      %99 = vector.shape_cast %98 : vector<8x4xbf16> to vector<1x8x4xbf16>
      %c0_91 = arith.constant 0 : index
      %c1_92 = arith.constant 1 : index
      %c0_93 = arith.constant 0 : index
      %100 = vector.load %arg15[%c0_91, %c1_92, %c0_93] : memref<6x10x4xbf16, #tpu.memory_space<vmem>>, vector<1x8x4xbf16>
      tpu.vector_store %arg15[%c0_91, %c1_92, %c0_93], %99 {strides = array<i32>} : memref<6x10x4xbf16, #tpu.memory_space<vmem>>, vector<1x8x4xbf16>,
    } else {
    }
    %c0_i32_20 = arith.constant 0 : i32
    %23 = arith.cmpi eq, %arg1, %c0_i32_20 : i32
    %24 = arith.extui %23 : i1 to i32
    %c0_i32_21 = arith.constant 0 : i32
    %25 = arith.cmpi ne, %24, %c0_i32_21 : i32
    scf.if %25 {
      %c0_85 = arith.constant 0 : index
      %c1_86 = arith.constant 1 : index
      %c0_87 = arith.constant 0 : index
      %89 = vector.load %arg15[%c0_85, %c1_86, %c0_87] : memref<6x10x4xbf16, #tpu.memory_space<vmem>>, vector<1x8x4xbf16>
      tpu.vector_store %arg15[%c0_85, %c1_86, %c0_87], %19 {strides = array<i32>} : memref<6x10x4xbf16, #tpu.memory_space<vmem>>, vector<1x8x4xbf16>,
    } else {
    }
    %c1_i32 = arith.constant 1 : i32
    %26 = arith.cmpi slt, %arg1, %c1_i32 : i32
    %27 = arith.extui %26 : i1 to i32
    %c0_i32_22 = arith.constant 0 : i32
    %28 = arith.cmpi ne, %27, %c0_i32_22 : i32
    scf.if %28 {
      %c0_85 = arith.constant 0 : index
      %c0_86 = arith.constant 0 : index
      %c0_87 = arith.constant 0 : index
      %c0_88 = arith.constant 0 : index
      %89 = vector.load %arg4[%c0_85, %c0_86, %c0_87, %c0_88] : memref<1x1x8x16xbf16, #tpu.memory_space<vmem>>, vector<1x1x8x16xbf16>
      %90 = vector.shape_cast %89 : vector<1x1x8x16xbf16> to vector<8x16xbf16>
      %cst_89 = arith.constant dense<0.000000e+00> : vector<8x4xf32>
      %91 = tpu.matmul %90, %0, %cst_89 {dimension_numbers = #tpu.dot_dimension_numbers<[1], [0], [0], [1], [0, 0, 1, 1], [], []>} : vector<8x16xbf16>, vector<16x4xbf16>, vector<8x4xf32> -> vector<8x4xf32>
      %92 = vector.broadcast %1 : vector<1x4xf32> to vector<8x4xf32>
      %93 = arith.mulf %91, %92 : vector<8x4xf32>
      %94 = vector.broadcast %2 : vector<1x4xf32> to vector<8x4xf32>
      %95 = arith.addf %93, %94 : vector<8x4xf32>
      %cst_90 = arith.constant 0.000000e+00 : f32
      %96 = vector.broadcast %cst_90 : f32 to vector<8x4xf32>
      %97 = arith.maximumf %95, %96 : vector<8x4xf32>
      %98 = arith.truncf %97 : vector<8x4xf32> to vector<8x4xbf16>
      %99 = vector.shape_cast %98 : vector<8x4xbf16> to vector<1x8x4xbf16>
      %c5 = arith.constant 5 : index
      %c1_91 = arith.constant 1 : index
      %c0_92 = arith.constant 0 : index
      %100 = vector.load %arg15[%c5, %c1_91, %c0_92] : memref<6x10x4xbf16, #tpu.memory_space<vmem>>, vector<1x8x4xbf16>
      tpu.vector_store %arg15[%c5, %c1_91, %c0_92], %99 {strides = array<i32>} : memref<6x10x4xbf16, #tpu.memory_space<vmem>>, vector<1x8x4xbf16>,
    } else {
    }
    %c1_i32_23 = arith.constant 1 : i32
    %29 = arith.cmpi eq, %arg1, %c1_i32_23 : i32
    %30 = arith.extui %29 : i1 to i32
    %c0_i32_24 = arith.constant 0 : i32
    %31 = arith.cmpi ne, %30, %c0_i32_24 : i32
    scf.if %31 {
      %c5 = arith.constant 5 : index
      %c1_85 = arith.constant 1 : index
      %c0_86 = arith.constant 0 : index
      %89 = vector.load %arg15[%c5, %c1_85, %c0_86] : memref<6x10x4xbf16, #tpu.memory_space<vmem>>, vector<1x8x4xbf16>
      tpu.vector_store %arg15[%c5, %c1_85, %c0_86], %19 {strides = array<i32>} : memref<6x10x4xbf16, #tpu.memory_space<vmem>>, vector<1x8x4xbf16>,
    } else {
    }
    %c0_25 = arith.constant 0 : index
    %c0_26 = arith.constant 0 : index
    %32 = vector.load %arg9[%c0_25, %c0_26] : memref<1x4xf32, #tpu.memory_space<vmem>>, vector<1x4xf32>
    %c0_27 = arith.constant 0 : index
    %c0_28 = arith.constant 0 : index
    %33 = vector.load %arg10[%c0_27, %c0_28] : memref<1x4xf32, #tpu.memory_space<vmem>>, vector<1x4xf32>
    %c0_29 = arith.constant 0 : index
    %c0_30 = arith.constant 0 : index
    %34 = vector.load %arg11[%c0_29, %c0_30] : memref<4x16xbf16, #tpu.memory_space<vmem>>, vector<4x16xbf16>
    %c0_31 = arith.constant 0 : index
    %c0_32 = arith.constant 0 : index
    %35 = vector.load %arg12[%c0_31, %c0_32] : memref<1x16xf32, #tpu.memory_space<vmem>>, vector<1x16xf32>
    %c0_33 = arith.constant 0 : index
    %c0_34 = arith.constant 0 : index
    %36 = vector.load %arg13[%c0_33, %c0_34] : memref<1x16xf32, #tpu.memory_space<vmem>>, vector<1x16xf32>
    %cst_35 = arith.constant 0.000000e+00 : f32
    %37 = vector.broadcast %cst_35 : f32 to vector<32x4xf32>
    %c0_36 = arith.constant 0 : index
    %c0_37 = arith.constant 0 : index
    %c0_38 = arith.constant 0 : index
    %38 = vector.load %arg15[%c0_36, %c0_37, %c0_38] : memref<6x10x4xbf16, #tpu.memory_space<vmem>>, vector<4x8x4xbf16>
    %c0_39 = arith.constant 0 : index
    %c1_40 = arith.constant 1 : index
    %c0_41 = arith.constant 0 : index
    %39 = vector.load %arg15[%c0_39, %c1_40, %c0_41] : memref<6x10x4xbf16, #tpu.memory_space<vmem>>, vector<4x8x4xbf16>
    %c0_42 = arith.constant 0 : index
    %c2 = arith.constant 2 : index
    %c0_43 = arith.constant 0 : index
    %40 = vector.load %arg15[%c0_42, %c2, %c0_43] : memref<6x10x4xbf16, #tpu.memory_space<vmem>>, vector<4x8x4xbf16>
    %41 = tpu.concatenate %38, %39, %40 in 2 : vector<4x8x4xbf16>, vector<4x8x4xbf16>, vector<4x8x4xbf16> -> vector<4x8x12xbf16>
    %42 = vector.shape_cast %41 : vector<4x8x12xbf16> to vector<32x12xbf16>
    %c0_44 = arith.constant 0 : index
    %c0_45 = arith.constant 0 : index
    %c0_46 = arith.constant 0 : index
    %43 = vector.load %arg8[%c0_44, %c0_45, %c0_46] : memref<3x12x4xbf16, #tpu.memory_space<vmem>>, vector<1x12x4xbf16>
    %44 = vector.shape_cast %43 : vector<1x12x4xbf16> to vector<12x4xbf16>
    %cst_47 = arith.constant dense<0.000000e+00> : vector<32x4xf32>
    %45 = tpu.matmul %42, %44, %cst_47 {dimension_numbers = #tpu.dot_dimension_numbers<[1], [0], [0], [1], [0, 0, 1, 1], [], []>} : vector<32x12xbf16>, vector<12x4xbf16>, vector<32x4xf32> -> vector<32x4xf32>
    %46 = arith.addf %37, %45 : vector<32x4xf32>
    %c1_48 = arith.constant 1 : index
    %c0_49 = arith.constant 0 : index
    %c0_50 = arith.constant 0 : index
    %47 = vector.load %arg15[%c1_48, %c0_49, %c0_50] : memref<6x10x4xbf16, #tpu.memory_space<vmem>>, vector<4x8x4xbf16>
    %c1_51 = arith.constant 1 : index
    %c1_52 = arith.constant 1 : index
    %c0_53 = arith.constant 0 : index
    %48 = vector.load %arg15[%c1_51, %c1_52, %c0_53] : memref<6x10x4xbf16, #tpu.memory_space<vmem>>, vector<4x8x4xbf16>
    %c1_54 = arith.constant 1 : index
    %c2_55 = arith.constant 2 : index
    %c0_56 = arith.constant 0 : index
    %49 = vector.load %arg15[%c1_54, %c2_55, %c0_56] : memref<6x10x4xbf16, #tpu.memory_space<vmem>>, vector<4x8x4xbf16>
    %50 = tpu.concatenate %47, %48, %49 in 2 : vector<4x8x4xbf16>, vector<4x8x4xbf16>, vector<4x8x4xbf16> -> vector<4x8x12xbf16>
    %51 = vector.shape_cast %50 : vector<4x8x12xbf16> to vector<32x12xbf16>
    %c1_57 = arith.constant 1 : index
    %c0_58 = arith.constant 0 : index
    %c0_59 = arith.constant 0 : index
    %52 = vector.load %arg8[%c1_57, %c0_58, %c0_59] : memref<3x12x4xbf16, #tpu.memory_space<vmem>>, vector<1x12x4xbf16>
    %53 = vector.shape_cast %52 : vector<1x12x4xbf16> to vector<12x4xbf16>
    %cst_60 = arith.constant dense<0.000000e+00> : vector<32x4xf32>
    %54 = tpu.matmul %51, %53, %cst_60 {dimension_numbers = #tpu.dot_dimension_numbers<[1], [0], [0], [1], [0, 0, 1, 1], [], []>} : vector<32x12xbf16>, vector<12x4xbf16>, vector<32x4xf32> -> vector<32x4xf32>
    %55 = arith.addf %46, %54 : vector<32x4xf32>
    %c2_61 = arith.constant 2 : index
    %c0_62 = arith.constant 0 : index
    %c0_63 = arith.constant 0 : index
    %56 = vector.load %arg15[%c2_61, %c0_62, %c0_63] : memref<6x10x4xbf16, #tpu.memory_space<vmem>>, vector<4x8x4xbf16>
    %c2_64 = arith.constant 2 : index
    %c1_65 = arith.constant 1 : index
    %c0_66 = arith.constant 0 : index
    %57 = vector.load %arg15[%c2_64, %c1_65, %c0_66] : memref<6x10x4xbf16, #tpu.memory_space<vmem>>, vector<4x8x4xbf16>
    %c2_67 = arith.constant 2 : index
    %c2_68 = arith.constant 2 : index
    %c0_69 = arith.constant 0 : index
    %58 = vector.load %arg15[%c2_67, %c2_68, %c0_69] : memref<6x10x4xbf16, #tpu.memory_space<vmem>>, vector<4x8x4xbf16>
    %59 = tpu.concatenate %56, %57, %58 in 2 : vector<4x8x4xbf16>, vector<4x8x4xbf16>, vector<4x8x4xbf16> -> vector<4x8x12xbf16>
    %60 = vector.shape_cast %59 : vector<4x8x12xbf16> to vector<32x12xbf16>
    %c2_70 = arith.constant 2 : index
    %c0_71 = arith.constant 0 : index
    %c0_72 = arith.constant 0 : index
    %61 = vector.load %arg8[%c2_70, %c0_71, %c0_72] : memref<3x12x4xbf16, #tpu.memory_space<vmem>>, vector<1x12x4xbf16>
    %62 = vector.shape_cast %61 : vector<1x12x4xbf16> to vector<12x4xbf16>
    %cst_73 = arith.constant dense<0.000000e+00> : vector<32x4xf32>
    %63 = tpu.matmul %60, %62, %cst_73 {dimension_numbers = #tpu.dot_dimension_numbers<[1], [0], [0], [1], [0, 0, 1, 1], [], []>} : vector<32x12xbf16>, vector<12x4xbf16>, vector<32x4xf32> -> vector<32x4xf32>
    %64 = arith.addf %55, %63 : vector<32x4xf32>
    %65 = vector.broadcast %32 : vector<1x4xf32> to vector<32x4xf32>
    %66 = arith.mulf %64, %65 : vector<32x4xf32>
    %67 = vector.broadcast %33 : vector<1x4xf32> to vector<32x4xf32>
    %68 = arith.addf %66, %67 : vector<32x4xf32>
    %cst_74 = arith.constant 0.000000e+00 : f32
    %69 = vector.broadcast %cst_74 : f32 to vector<32x4xf32>
    %70 = arith.maximumf %68, %69 : vector<32x4xf32>
    %71 = arith.truncf %70 : vector<32x4xf32> to vector<32x4xbf16>
    %cst_75 = arith.constant dense<0.000000e+00> : vector<32x16xf32>
    %72 = tpu.matmul %71, %34, %cst_75 {dimension_numbers = #tpu.dot_dimension_numbers<[1], [0], [0], [1], [0, 0, 1, 1], [], []>} : vector<32x4xbf16>, vector<4x16xbf16>, vector<32x16xf32> -> vector<32x16xf32>
    %73 = vector.broadcast %35 : vector<1x16xf32> to vector<32x16xf32>
    %74 = arith.mulf %72, %73 : vector<32x16xf32>
    %75 = vector.broadcast %36 : vector<1x16xf32> to vector<32x16xf32>
    %76 = arith.addf %74, %75 : vector<32x16xf32>
    %c0_76 = arith.constant 0 : index
    %c0_77 = arith.constant 0 : index
    %c0_78 = arith.constant 0 : index
    %c0_79 = arith.constant 0 : index
    %77 = vector.load %arg2[%c0_76, %c0_77, %c0_78, %c0_79] : memref<1x4x8x16xbf16, #tpu.memory_space<vmem>>, vector<1x4x8x16xbf16>
    %78 = vector.shape_cast %77 : vector<1x4x8x16xbf16> to vector<4x8x16xbf16>
    %79 = vector.shape_cast %78 : vector<4x8x16xbf16> to vector<32x16xbf16>
    %80 = arith.extf %79 : vector<32x16xbf16> to vector<32x16xf32>
    %81 = arith.addf %76, %80 : vector<32x16xf32>
    %cst_80 = arith.constant 0.000000e+00 : f32
    %82 = vector.broadcast %cst_80 : f32 to vector<32x16xf32>
    %83 = arith.maximumf %81, %82 : vector<32x16xf32>
    %84 = vector.shape_cast %83 : vector<32x16xf32> to vector<4x8x16xf32>
    %85 = arith.truncf %84 : vector<4x8x16xf32> to vector<4x8x16xbf16>
    %c0_81 = arith.constant 0 : index
    %c0_82 = arith.constant 0 : index
    %c0_83 = arith.constant 0 : index
    %c0_84 = arith.constant 0 : index
    %86 = vector.load %arg14[%c0_81, %c0_82, %c0_83, %c0_84] : memref<1x4x8x16xbf16, #tpu.memory_space<vmem>>, vector<1x4x8x16xbf16>
    %87 = vector.shape_cast %86 : vector<1x4x8x16xbf16> to vector<4x8x16xbf16>
    %88 = vector.shape_cast %85 : vector<4x8x16xbf16> to vector<1x4x8x16xbf16>
    tpu.vector_store %arg14[%c0_81, %c0_82, %c0_83, %c0_84], %88 {strides = array<i32>} : memref<1x4x8x16xbf16, #tpu.memory_space<vmem>>, vector<1x4x8x16xbf16>,
    return
  }
  func.func @transform_0(%arg0: i32, %arg1: i32) -> (i32, i32, i32, i32) {
    %c0_i32 = arith.constant 0 : i32
    %c0_i32_0 = arith.constant 0 : i32
    %c0_i32_1 = arith.constant 0 : i32
    return %arg0, %arg1, %c0_i32, %c0_i32_0 : i32, i32, i32, i32
  }
  func.func @transform_1(%arg0: i32, %arg1: i32) -> (i32, i32, i32, i32) {
    %c4_i32 = arith.constant 4 : i32
    %0 = arith.muli %arg1, %c4_i32 : i32
    %c1_i32 = arith.constant 1 : i32
    %1 = arith.subi %0, %c1_i32 : i32
    %c0_i32 = arith.constant 0 : i32
    %2 = arith.maxsi %1, %c0_i32 : i32
    %c0_i32_0 = arith.constant 0 : i32
    %c0_i32_1 = arith.constant 0 : i32
    %c0_i32_2 = arith.constant 0 : i32
    return %arg0, %2, %c0_i32_0, %c0_i32_1 : i32, i32, i32, i32
  }
  func.func @transform_2(%arg0: i32, %arg1: i32) -> (i32, i32, i32, i32) {
    %c1_i32 = arith.constant 1 : i32
    %0 = arith.addi %arg1, %c1_i32 : i32
    %c4_i32 = arith.constant 4 : i32
    %1 = arith.muli %0, %c4_i32 : i32
    %c7_i32 = arith.constant 7 : i32
    %2 = arith.minsi %1, %c7_i32 : i32
    %c0_i32 = arith.constant 0 : i32
    %c0_i32_0 = arith.constant 0 : i32
    %c0_i32_1 = arith.constant 0 : i32
    return %arg0, %2, %c0_i32, %c0_i32_0 : i32, i32, i32, i32
  }
  func.func @transform_3(%arg0: i32, %arg1: i32) -> (i32, i32) {
    %c0_i32 = arith.constant 0 : i32
    %c0_i32_0 = arith.constant 0 : i32
    %c0_i32_1 = arith.constant 0 : i32
    return %c0_i32, %c0_i32_0 : i32, i32
  }
  func.func @transform_4(%arg0: i32, %arg1: i32) -> (i32, i32) {
    %c0_i32 = arith.constant 0 : i32
    %c0_i32_0 = arith.constant 0 : i32
    %c0_i32_1 = arith.constant 0 : i32
    return %c0_i32, %c0_i32_0 : i32, i32
  }
  func.func @transform_5(%arg0: i32, %arg1: i32) -> (i32, i32) {
    %c0_i32 = arith.constant 0 : i32
    %c0_i32_0 = arith.constant 0 : i32
    %c0_i32_1 = arith.constant 0 : i32
    return %c0_i32, %c0_i32_0 : i32, i32
  }
  func.func @transform_6(%arg0: i32, %arg1: i32) -> (i32, i32, i32) {
    %c0_i32 = arith.constant 0 : i32
    %c0_i32_0 = arith.constant 0 : i32
    %c0_i32_1 = arith.constant 0 : i32
    %c0_i32_2 = arith.constant 0 : i32
    return %c0_i32, %c0_i32_0, %c0_i32_1 : i32, i32, i32
  }
  func.func @transform_7(%arg0: i32, %arg1: i32) -> (i32, i32) {
    %c0_i32 = arith.constant 0 : i32
    %c0_i32_0 = arith.constant 0 : i32
    %c0_i32_1 = arith.constant 0 : i32
    return %c0_i32, %c0_i32_0 : i32, i32
  }
  func.func @transform_8(%arg0: i32, %arg1: i32) -> (i32, i32) {
    %c0_i32 = arith.constant 0 : i32
    %c0_i32_0 = arith.constant 0 : i32
    %c0_i32_1 = arith.constant 0 : i32
    return %c0_i32, %c0_i32_0 : i32, i32
  }
  func.func @transform_9(%arg0: i32, %arg1: i32) -> (i32, i32) {
    %c0_i32 = arith.constant 0 : i32
    %c0_i32_0 = arith.constant 0 : i32
    %c0_i32_1 = arith.constant 0 : i32
    return %c0_i32, %c0_i32_0 : i32, i32
  }
  func.func @transform_10(%arg0: i32, %arg1: i32) -> (i32, i32) {
    %c0_i32 = arith.constant 0 : i32
    %c0_i32_0 = arith.constant 0 : i32
    %c0_i32_1 = arith.constant 0 : i32
    return %c0_i32, %c0_i32_0 : i32, i32
  }
  func.func @transform_11(%arg0: i32, %arg1: i32) -> (i32, i32) {
    %c0_i32 = arith.constant 0 : i32
    %c0_i32_0 = arith.constant 0 : i32
    %c0_i32_1 = arith.constant 0 : i32
    return %c0_i32, %c0_i32_0 : i32, i32
  }
  func.func @transform_12(%arg0: i32, %arg1: i32) -> (i32, i32, i32, i32) {
    %c0_i32 = arith.constant 0 : i32
    %c0_i32_0 = arith.constant 0 : i32
    %c0_i32_1 = arith.constant 0 : i32
    return %arg0, %arg1, %c0_i32, %c0_i32_0 : i32, i32, i32, i32
  }
}

</mosaic_0001>

<llo_original>
// kernel: bottleneck_pallas.1
$region0: #{bottleneck_pallas.1}
  #allocation0 [shape = 'u32[]', space=smem, size = 0x4, offset = 0x4, fixed_abs, tag = 'smem constant byte address 0x4 - core index']
  #allocation1 [shape = 'u32[144,128]{1,0:T(1,128)}', space=vmem, size = 0x12000, scoped, tag = 'internal scratch']
  #allocation2 [shape = 'bf16[6,10,4]{2,1,0:T(8,128)(2,1)}', space=vmem, size = 0x6000, scoped, tag = 'scratch operand']
  %s0 = inlined_call_operand.vmem [shape: bf16[2,8,8,16], index: 0, kind: input, shape index: {}, may-alias: {0,1,2}]
  %s1 = inlined_call_operand.vmem [shape: bf16[2,8,8,16], index: 1, kind: input, shape index: {}, may-alias: {0,1,2}]
  %s2 = inlined_call_operand.vmem [shape: bf16[2,8,8,16], index: 2, kind: input, shape index: {}, may-alias: {0,1,2}]
  %s3 = inlined_call_operand.vmem [shape: bf16[16,4], index: 3, kind: input, shape index: {}]
  %s4 = inlined_call_operand.vmem [shape: f32[1,4], index: 4, kind: input, shape index: {}]
  %s5 = inlined_call_operand.vmem [shape: f32[1,4], index: 5, kind: input, shape index: {}]
  %s6 = inlined_call_operand.vmem [shape: bf16[3,12,4], index: 6, kind: input, shape index: {}]
  %s7 = inlined_call_operand.vmem [shape: f32[1,4], index: 7, kind: input, shape index: {}]
  %s8 = inlined_call_operand.vmem [shape: f32[1,4], index: 8, kind: input, shape index: {}]
  %s9 = inlined_call_operand.vmem [shape: bf16[4,16], index: 9, kind: input, shape index: {}]
  %s10 = inlined_call_operand.vmem [shape: f32[1,16], index: 10, kind: input, shape index: {}]
  %s11 = inlined_call_operand.vmem [shape: f32[1,16], index: 11, kind: input, shape index: {}]
  %s12 = inlined_call_operand.vmem [shape: bf16[2,8,8,16], index: 12, kind: output, shape index: {}]
  %s13 = sld [smem:[#allocation0]]
  $region97: #{bottleneck_pallas.1} parent=0
    _
  %s15 = ssub.s32 1, %s13
  %s16 = scalar_select 0, %s15, %s13
  loop: start=0, step=1, limit=6
  $region2: #{bottleneck_pallas.1} parent=0 // loop_pre_header
    _
  $region3: #{bottleneck_pallas.1} parent=0 // loop_header
    %s18 = sphi 0, %s22
    %p19 = scmp.ge.s32.totalorder %s18, 6
    %s25 = sphi 0, %s37
    %s26 = sphi 0, %s33
    %s27 = sphi 0, %s25
    %s28 = sphi 0, %s26
    %s29 = sphi 0, %s27
    %s30 = sphi 0, %s28
    %s42 = sphi 0, %s44
    %s45 = sphi 0, %s42
    %s46 = sphi 0, %s45
    %s62 = sphi 0, %s46
    %s78 = sphi 0, %s80
    %s81 = sphi 0, %s78
    %s82 = sphi 0, %s81
    %s98 = sphi 0, %s82
    %s114 = sphi 0, %s116
    %s117 = sphi 0, %s114
    %s118 = sphi 0, %s117
    %s134 = sphi 0, %s118
    %s138 = sphi 0, %s138
    %s140 = sphi 0, %s138
    %s141 = sphi 0, %s140
    %s155 = sphi 0, %s141
    %s159 = sphi 0, %s159
    %s161 = sphi 0, %s159
    %s162 = sphi 0, %s161
    %s176 = sphi 0, %s162
    %s180 = sphi 0, %s180
    %s182 = sphi 0, %s180
    %s183 = sphi 0, %s182
    %s197 = sphi 0, %s183
    %s201 = sphi 0, %s201
    %s203 = sphi 0, %s201
    %s204 = sphi 0, %s203
    %s218 = sphi 0, %s204
    %s222 = sphi 0, %s222
    %s224 = sphi 0, %s222
    %s225 = sphi 0, %s224
    %s239 = sphi 0, %s225
    %s243 = sphi 0, %s243
    %s245 = sphi 0, %s243
    %s246 = sphi 0, %s245
    %s260 = sphi 0, %s246
    %s264 = sphi 0, %s264
    %s266 = sphi 0, %s264
    %s267 = sphi 0, %s266
    %s281 = sphi 0, %s267
    %s285 = sphi 0, %s285
    %s287 = sphi 0, %s285
    %s288 = sphi 0, %s287
    %s302 = sphi 0, %s288
    %s306 = sphi 0, %s306
    %s308 = sphi 0, %s306
    %s309 = sphi 0, %s308
    %s323 = sphi 0, %s309
    %s331 = sphi 0, %s333
    %s334 = sphi 0, %s331
    %s335 = sphi 0, %s334
    %s351 = sphi 0, %s335
  $region4: #{bottleneck_pallas.1} parent=0 // loop_header_branch
    %21 = sbr.rel (%p19) target = $region8
  $region5: #{bottleneck_pallas.1} parent=0 // loop_body
    %s23 = ssub.s32 %s18, 1
    %s24 = ssub.s32 %s18, 2
    %s31 = sadd.s32 1, %s26
    %p32 = scmp.ge.s32.totalorder %s31, 2
    %s33 = scalar_select %p32, 0, %s31
    %s34 = sadd.s32 1, %s25
    %s35 = scalar_select %p32, %s34, %s25
    %p36 = scmp.ge.s32.totalorder %s35, 2
    %s37 = scalar_select %p36, 0, %s35
    %s38 = ssub.s32 %s25, %s37
    %s39 = ssub.s32 %s26, %s33
    %s40 = sor.u32 %s38, %s39
    %p41 = scmp.eq.s32.totalorder %s40, 0
    %s43 = sadd.s32 %s42, 1
    %s44 = scalar_select %p41, %s42, %s43
    %p47 = pneg %p41
    %p48 = scmp.eq.s32.totalorder %s18, 3
    %p49 = por %p47, %p48
    %p50 = scmp.ne.s32.totalorder %s42, %s45
    %p51 = scmp.eq.s32.totalorder %s18, 0
    %p52 = por %p50, %p51
    %p53 = scmp.ne.s32.totalorder %s42, %s45
    %p54 = scmp.eq.s32.totalorder %s23, 3
    %p55 = por %p53, %p54
    %p56 = scmp.ne.s32.totalorder %s45, %s46
    %p57 = scmp.eq.s32.totalorder %s23, 0
    %p58 = por %p56, %p57
    %p59 = scmp.ne.s32.totalorder %s45, %s46
    %p60 = scmp.eq.s32.totalorder %s24, 3
    %p61 = por %p59, %p60
    %p63 = scmp.ne.s32.totalorder %s46, %s62
    %p64 = scmp.eq.s32.totalorder %s24, 0
    %p65 = por %p63, %p64
    %s66 = smul.u32 %s26, 4
    %s67 = ssub.s32 %s66, 1
    %p68 = scmp.gt.s32.totalorder %s67, 0
    %s69 = scalar_select %p68, %s67, 0
    %s70 = smul.u32 %s33, 4
    %s71 = ssub.s32 %s70, 1
    %p72 = scmp.gt.s32.totalorder %s71, 0
    %s73 = scalar_select %p72, %s71, 0
    %s74 = ssub.s32 %s25, %s37
    %s75 = ssub.s32 %s69, %s73
    %s76 = sor.u32 %s74, %s75
    %p77 = scmp.eq.s32.totalorder %s76, 0
    %s79 = sadd.s32 %s78, 1
    %s80 = scalar_select %p77, %s78, %s79
    %p83 = pneg %p77
    %p84 = scmp.eq.s32.totalorder %s18, 3
    %p85 = por %p83, %p84
    %p86 = scmp.ne.s32.totalorder %s78, %s81
    %p87 = scmp.eq.s32.totalorder %s18, 0
    %p88 = por %p86, %p87
    %p89 = scmp.ne.s32.totalorder %s78, %s81
    %p90 = scmp.eq.s32.totalorder %s23, 3
    %p91 = por %p89, %p90
    %p92 = scmp.ne.s32.totalorder %s81, %s82
    %p93 = scmp.eq.s32.totalorder %s23, 0
    %p94 = por %p92, %p93
    %p95 = scmp.ne.s32.totalorder %s81, %s82
    %p96 = scmp.eq.s32.totalorder %s24, 3
    %p97 = por %p95, %p96
    %p99 = scmp.ne.s32.totalorder %s82, %s98
    %p100 = scmp.eq.s32.totalorder %s24, 0
    %p101 = por %p99, %p100
    %s102 = sadd.s32 %s26, 1
    %s103 = smul.u32 %s102, 4
    %p104 = scmp.lt.s32.totalorder %s103, 7
    %s105 = scalar_select %p104, %s103, 7
    %s106 = sadd.s32 %s33, 1
    %s107 = smul.u32 %s106, 4
    %p108 = scmp.lt.s32.totalorder %s107, 7
    %s109 = scalar_select %p108, %s107, 7
    %s110 = ssub.s32 %s25, %s37
    %s111 = ssub.s32 %s105, %s109
    %s112 = sor.u32 %s110, %s111
    %p113 = scmp.eq.s32.totalorder %s112, 0
    %s115 = sadd.s32 %s114, 1
    %s116 = scalar_select %p113, %s114, %s115
    %p119 = pneg %p113
    %p120 = scmp.eq.s32.totalorder %s18, 3
    %p121 = por %p119, %p120
    %p122 = scmp.ne.s32.totalorder %s114, %s117
    %p123 = scmp.eq.s32.totalorder %s18, 0
    %p124 = por %p122, %p123
    %p125 = scmp.ne.s32.totalorder %s114, %s117
    %p126 = scmp.eq.s32.totalorder %s23, 3
    %p127 = por %p125, %p126
    %p128 = scmp.ne.s32.totalorder %s117, %s118
    %p129 = scmp.eq.s32.totalorder %s23, 0
    %p130 = por %p128, %p129
    %p131 = scmp.ne.s32.totalorder %s117, %s118
    %p132 = scmp.eq.s32.totalorder %s24, 3
    %p133 = por %p131, %p132
    %p135 = scmp.ne.s32.totalorder %s118, %s134
    %p136 = scmp.eq.s32.totalorder %s24, 0
    %p137 = por %p135, %p136
    %s139 = sadd.s32 %s138, 1
    %p142 = scmp.eq.s32.totalorder %s18, 3
    %p143 = scmp.ne.s32.totalorder %s138, %s140
    %p144 = scmp.eq.s32.totalorder %s18, 0
    %p145 = por %p143, %p144
    %p146 = scmp.ne.s32.totalorder %s138, %s140
    %p147 = scmp.eq.s32.totalorder %s23, 3
    %p148 = por %p146, %p147
    %p149 = scmp.ne.s32.totalorder %s140, %s141
    %p150 = scmp.eq.s32.totalorder %s23, 0
    %p151 = por %p149, %p150
    %p152 = scmp.ne.s32.totalorder %s140, %s141
    %p153 = scmp.eq.s32.totalorder %s24, 3
    %p154 = por %p152, %p153
    %p156 = scmp.ne.s32.totalorder %s141, %s155
    %p157 = scmp.eq.s32.totalorder %s24, 0
    %p158 = por %p156, %p157
    %s160 = sadd.s32 %s159, 1
    %p163 = scmp.eq.s32.totalorder %s18, 3
    %p164 = scmp.ne.s32.totalorder %s159, %s161
    %p165 = scmp.eq.s32.totalorder %s18, 0
    %p166 = por %p164, %p165
    %p167 = scmp.ne.s32.totalorder %s159, %s161
    %p168 = scmp.eq.s32.totalorder %s23, 3
    %p169 = por %p167, %p168
    %p170 = scmp.ne.s32.totalorder %s161, %s162
    %p171 = scmp.eq.s32.totalorder %s23, 0
    %p172 = por %p170, %p171
    %p173 = scmp.ne.s32.totalorder %s161, %s162
    %p174 = scmp.eq.s32.totalorder %s24, 3
    %p175 = por %p173, %p174
    %p177 = scmp.ne.s32.totalorder %s162, %s176
    %p178 = scmp.eq.s32.totalorder %s24, 0
    %p179 = por %p177, %p178
    %s181 = sadd.s32 %s180, 1
    %p184 = scmp.eq.s32.totalorder %s18, 3
    %p185 = scmp.ne.s32.totalorder %s180, %s182
    %p186 = scmp.eq.s32.totalorder %s18, 0
    %p187 = por %p185, %p186
    %p188 = scmp.ne.s32.totalorder %s180, %s182
    %p189 = scmp.eq.s32.totalorder %s23, 3
    %p190 = por %p188, %p189
    %p191 = scmp.ne.s32.totalorder %s182, %s183
    %p192 = scmp.eq.s32.totalorder %s23, 0
    %p193 = por %p191, %p192
    %p194 = scmp.ne.s32.totalorder %s182, %s183
    %p195 = scmp.eq.s32.totalorder %s24, 3
    %p196 = por %p194, %p195
    %p198 = scmp.ne.s32.totalorder %s183, %s197
    %p199 = scmp.eq.s32.totalorder %s24, 0
    %p200 = por %p198, %p199
    %s202 = sadd.s32 %s201, 1
    %p205 = scmp.eq.s32.totalorder %s18, 3
    %p206 = scmp.ne.s32.totalorder %s201, %s203
    %p207 = scmp.eq.s32.totalorder %s18, 0
    %p208 = por %p206, %p207
    %p209 = scmp.ne.s32.totalorder %s201, %s203
    %p210 = scmp.eq.s32.totalorder %s23, 3
    %p211 = por %p209, %p210
    %p212 = scmp.ne.s32.totalorder %s203, %s204
    %p213 = scmp.eq.s32.totalorder %s23, 0
    %p214 = por %p212, %p213
    %p215 = scmp.ne.s32.totalorder %s203, %s204
    %p216 = scmp.eq.s32.totalorder %s24, 3
    %p217 = por %p215, %p216
    %p219 = scmp.ne.s32.totalorder %s204, %s218
    %p220 = scmp.eq.s32.totalorder %s24, 0
    %p221 = por %p219, %p220
    %s223 = sadd.s32 %s222, 1
    %p226 = scmp.eq.s32.totalorder %s18, 3
    %p227 = scmp.ne.s32.totalorder %s222, %s224
    %p228 = scmp.eq.s32.totalorder %s18, 0
    %p229 = por %p227, %p228
    %p230 = scmp.ne.s32.totalorder %s222, %s224
    %p231 = scmp.eq.s32.totalorder %s23, 3
    %p232 = por %p230, %p231
    %p233 = scmp.ne.s32.totalorder %s224, %s225
    %p234 = scmp.eq.s32.totalorder %s23, 0
    %p235 = por %p233, %p234
    %p236 = scmp.ne.s32.totalorder %s224, %s225
    %p237 = scmp.eq.s32.totalorder %s24, 3
    %p238 = por %p236, %p237
    %p240 = scmp.ne.s32.totalorder %s225, %s239
    %p241 = scmp.eq.s32.totalorder %s24, 0
    %p242 = por %p240, %p241
    %s244 = sadd.s32 %s243, 1
    %p247 = scmp.eq.s32.totalorder %s18, 3
    %p248 = scmp.ne.s32.totalorder %s243, %s245
    %p249 = scmp.eq.s32.totalorder %s18, 0
    %p250 = por %p248, %p249
    %p251 = scmp.ne.s32.totalorder %s243, %s245
    %p252 = scmp.eq.s32.totalorder %s23, 3
    %p253 = por %p251, %p252
    %p254 = scmp.ne.s32.totalorder %s245, %s246
    %p255 = scmp.eq.s32.totalorder %s23, 0
    %p256 = por %p254, %p255
    %p257 = scmp.ne.s32.totalorder %s245, %s246
    %p258 = scmp.eq.s32.totalorder %s24, 3
    %p259 = por %p257, %p258
    %p261 = scmp.ne.s32.totalorder %s246, %s260
    %p262 = scmp.eq.s32.totalorder %s24, 0
    %p263 = por %p261, %p262
    %s265 = sadd.s32 %s264, 1
    %p268 = scmp.eq.s32.totalorder %s18, 3
    %p269 = scmp.ne.s32.totalorder %s264, %s266
    %p270 = scmp.eq.s32.totalorder %s18, 0
    %p271 = por %p269, %p270
    %p272 = scmp.ne.s32.totalorder %s264, %s266
    %p273 = scmp.eq.s32.totalorder %s23, 3
    %p274 = por %p272, %p273
    %p275 = scmp.ne.s32.totalorder %s266, %s267
    %p276 = scmp.eq.s32.totalorder %s23, 0
    %p277 = por %p275, %p276
    %p278 = scmp.ne.s32.totalorder %s266, %s267
    %p279 = scmp.eq.s32.totalorder %s24, 3
    %p280 = por %p278, %p279
    %p282 = scmp.ne.s32.totalorder %s267, %s281
    %p283 = scmp.eq.s32.totalorder %s24, 0
    %p284 = por %p282, %p283
    %s286 = sadd.s32 %s285, 1
    %p289 = scmp.eq.s32.totalorder %s18, 3
    %p290 = scmp.ne.s32.totalorder %s285, %s287
    %p291 = scmp.eq.s32.totalorder %s18, 0
    %p292 = por %p290, %p291
    %p293 = scmp.ne.s32.totalorder %s285, %s287
    %p294 = scmp.eq.s32.totalorder %s23, 3
    %p295 = por %p293, %p294
    %p296 = scmp.ne.s32.totalorder %s287, %s288
    %p297 = scmp.eq.s32.totalorder %s23, 0
    %p298 = por %p296, %p297
    %p299 = scmp.ne.s32.totalorder %s287, %s288
    %p300 = scmp.eq.s32.totalorder %s24, 3
    %p301 = por %p299, %p300
    %p303 = scmp.ne.s32.totalorder %s288, %s302
    %p304 = scmp.eq.s32.totalorder %s24, 0
    %p305 = por %p303, %p304
    %s307 = sadd.s32 %s306, 1
    %p310 = scmp.eq.s32.totalorder %s18, 3
    %p311 = scmp.ne.s32.totalorder %s306, %s308
    %p312 = scmp.eq.s32.totalorder %s18, 0
    %p313 = por %p311, %p312
    %p314 = scmp.ne.s32.totalorder %s306, %s308
    %p315 = scmp.eq.s32.totalorder %s23, 3
    %p316 = por %p314, %p315
    %p317 = scmp.ne.s32.totalorder %s308, %s309
    %p318 = scmp.eq.s32.totalorder %s23, 0
    %p319 = por %p317, %p318
    %p320 = scmp.ne.s32.totalorder %s308, %s309
    %p321 = scmp.eq.s32.totalorder %s24, 3
    %p322 = por %p320, %p321
    %p324 = scmp.ne.s32.totalorder %s309, %s323
    %p325 = scmp.eq.s32.totalorder %s24, 0
    %p326 = por %p324, %p325
    %s327 = ssub.s32 %s25, %s37
    %s328 = ssub.s32 %s26, %s33
    %s329 = sor.u32 %s327, %s328
    %p330 = scmp.eq.s32.totalorder %s329, 0
    %s332 = sadd.s32 %s331, 1
    %s333 = scalar_select %p330, %s331, %s332
    %p336 = pneg %p330
    %p337 = scmp.eq.s32.totalorder %s18, 3
    %p338 = por %p336, %p337
    %p339 = scmp.ne.s32.totalorder %s331, %s334
    %p340 = scmp.eq.s32.totalorder %s18, 0
    %p341 = por %p339, %p340
    %p342 = scmp.ne.s32.totalorder %s331, %s334
    %p343 = scmp.eq.s32.totalorder %s23, 3
    %p344 = por %p342, %p343
    %p345 = scmp.ne.s32.totalorder %s334, %s335
    %p346 = scmp.eq.s32.totalorder %s23, 0
    %p347 = por %p345, %p346
    %p348 = scmp.ne.s32.totalorder %s334, %s335
    %p349 = scmp.eq.s32.totalorder %s24, 3
    %p350 = por %p348, %p349
    %p352 = scmp.ne.s32.totalorder %s335, %s351
    %p353 = scmp.eq.s32.totalorder %s24, 0
    %p354 = por %p352, %p353
    %p355 = scmp.le.s32.totalorder 1, %s18
    %p356 = scmp.lt.s32.totalorder %s18, 5
    %p357 = pnand %p355, %p356
    %p358 = pneg %p357
    // Predicated region
    $region9: #{bottleneck_pallas.1} parent=5 // pred_check
      _
    $region10: #{bottleneck_pallas.1} parent=5 // pred_check_branch
      %360 = sbr.rel (%p357) target = $region12
    $region11: #{bottleneck_pallas.1} parent=5 // pred_region
      %s361 = ssub.s32 %s18, 1
      // Predicated region
      $region13: #{bottleneck_pallas.1} parent=11 // pred_check
        %p362 = pneg %p151
      $region14: #{bottleneck_pallas.1} parent=11 // pred_check_branch
        %364 = sbr.rel (%p362) target = $region16
      $region15: #{bottleneck_pallas.1} parent=11 // pred_region
        _
      $region16: #{bottleneck_pallas.1} parent=11 // pred_fallthru
        _
      // Predicated region
      $region17: #{bottleneck_pallas.1} parent=11 // pred_check
        %p365 = pneg %p172
      $region18: #{bottleneck_pallas.1} parent=11 // pred_check_branch
        %367 = sbr.rel (%p365) target = $region20
      $region19: #{bottleneck_pallas.1} parent=11 // pred_region
        _
      $region20: #{bottleneck_pallas.1} parent=11 // pred_fallthru
        _
      // Predicated region
      $region21: #{bottleneck_pallas.1} parent=11 // pred_check
        %p368 = pneg %p193
      $region22: #{bottleneck_pallas.1} parent=11 // pred_check_branch
        %370 = sbr.rel (%p368) target = $region24
      $region23: #{bottleneck_pallas.1} parent=11 // pred_region
        _
      $region24: #{bottleneck_pallas.1} parent=11 // pred_fallthru
        _
      // Predicated region
      $region25: #{bottleneck_pallas.1} parent=11 // pred_check
        %p371 = pneg %p214
      $region26: #{bottleneck_pallas.1} parent=11 // pred_check_branch
        %373 = sbr.rel (%p371) target = $region28
      $region27: #{bottleneck_pallas.1} parent=11 // pred_region
        _
      $region28: #{bottleneck_pallas.1} parent=11 // pred_fallthru
        _
      // Predicated region
      $region29: #{bottleneck_pallas.1} parent=11 // pred_check
        %p374 = pneg %p235
      $region30: #{bottleneck_pallas.1} parent=11 // pred_check_branch
        %376 = sbr.rel (%p374) target = $region32
      $region31: #{bottleneck_pallas.1} parent=11 // pred_region
        _
      $region32: #{bottleneck_pallas.1} parent=11 // pred_fallthru
        _
      // Predicated region
      $region33: #{bottleneck_pallas.1} parent=11 // pred_check
        %p377 = pneg %p256
      $region34: #{bottleneck_pallas.1} parent=11 // pred_check_branch
        %379 = sbr.rel (%p377) target = $region36
      $region35: #{bottleneck_pallas.1} parent=11 // pred_region
        _
      $region36: #{bottleneck_pallas.1} parent=11 // pred_fallthru
        _
      // Predicated region
      $region37: #{bottleneck_pallas.1} parent=11 // pred_check
        %p380 = pneg %p277
      $region38: #{bottleneck_pallas.1} parent=11 // pred_check_branch
        %382 = sbr.rel (%p380) target = $region40
      $region39: #{bottleneck_pallas.1} parent=11 // pred_region
        _
      $region40: #{bottleneck_pallas.1} parent=11 // pred_fallthru
        _
      // Predicated region
      $region41: #{bottleneck_pallas.1} parent=11 // pred_check
        %p383 = pneg %p298
      $region42: #{bottleneck_pallas.1} parent=11 // pred_check_branch
        %385 = sbr.rel (%p383) target = $region44
      $region43: #{bottleneck_pallas.1} parent=11 // pred_region
        _
      $region44: #{bottleneck_pallas.1} parent=11 // pred_fallthru
        _
      // Predicated region
      $region45: #{bottleneck_pallas.1} parent=11 // pred_check
        %p386 = pneg %p319
      $region46: #{bottleneck_pallas.1} parent=11 // pred_check_branch
        %388 = sbr.rel (%p386) target = $region48
      $region47: #{bottleneck_pallas.1} parent=11 // pred_region
        _
      $region48: #{bottleneck_pallas.1} parent=11 // pred_fallthru
        _
    $region12: #{bottleneck_pallas.1} parent=5 // pred_fallthru
      _
    %p389 = scmp.lt.s32.totalorder %s18, 4
    // Predicated region
    $region49: #{bottleneck_pallas.1} parent=5 // pred_check
      %p390 = pneg %p389
    $region50: #{bottleneck_pallas.1} parent=5 // pred_check_branch
      %392 = sbr.rel (%p390) target = $region52
    $region51: #{bottleneck_pallas.1} parent=5 // pred_region
      // Predicated region
      $region53: #{bottleneck_pallas.1} parent=51 // pred_check
        %p393 = pneg %p52
      $region54: #{bottleneck_pallas.1} parent=51 // pred_check_branch
        %395 = sbr.rel (%p393) target = $region56
      $region55: #{bottleneck_pallas.1} parent=51 // pred_region
        %s396 = smul.u32 4, %s26
        %p397 = scmp.lt.s32.totalorder %s25, 1
        %s398 = scalar_select %p397, %s25, 1
        %p399 = scmp.lt.s32.totalorder %s396, 7
        %s400 = scalar_select %p399, %s396, 7
        %s401 = smul.addr %s398, 8
        %s402 = sadd.s32 %s400, %s401
        %s403 = smul.addr %s402, 4
        %s404 = scalar_lea.vmem %s0, %s403
        %s405 = smul.u32 4, %s26
      $region56: #{bottleneck_pallas.1} parent=51 // pred_fallthru
        _
      // Predicated region
      $region57: #{bottleneck_pallas.1} parent=51 // pred_check
        %p406 = pneg %p88
      $region58: #{bottleneck_pallas.1} parent=51 // pred_check_branch
        %408 = sbr.rel (%p406) target = $region60
      $region59: #{bottleneck_pallas.1} parent=51 // pred_region
        %s409 = smul.u32 %s26, 4
        %s410 = ssub.s32 %s409, 1
        %p411 = scmp.gt.s32.totalorder %s410, 0
        %s412 = scalar_select %p411, %s410, 0
        %p413 = scmp.lt.s32.totalorder %s25, 1
        %s414 = scalar_select %p413, %s25, 1
        %p415 = scmp.lt.s32.totalorder %s412, 7
        %s416 = scalar_select %p415, %s412, 7
        %s417 = smul.addr %s414, 8
        %s418 = sadd.s32 %s416, %s417
        %s419 = smul.addr %s418, 4
        %s420 = scalar_lea.vmem %s1, %s419
        %s421 = smul.u32 %s26, 4
        %s422 = ssub.s32 %s421, 1
        %p423 = scmp.gt.s32.totalorder %s422, 0
        %s424 = scalar_select %p423, %s422, 0
      $region60: #{bottleneck_pallas.1} parent=51 // pred_fallthru
        _
      // Predicated region
      $region61: #{bottleneck_pallas.1} parent=51 // pred_check
        %p425 = pneg %p124
      $region62: #{bottleneck_pallas.1} parent=51 // pred_check_branch
        %427 = sbr.rel (%p425) target = $region64
      $region63: #{bottleneck_pallas.1} parent=51 // pred_region
        %s428 = sadd.s32 %s26, 1
        %s429 = smul.u32 %s428, 4
        %p430 = scmp.lt.s32.totalorder %s429, 7
        %s431 = scalar_select %p430, %s429, 7
        %p432 = scmp.lt.s32.totalorder %s25, 1
        %s433 = scalar_select %p432, %s25, 1
        %p434 = scmp.lt.s32.totalorder %s431, 7
        %s435 = scalar_select %p434, %s431, 7
        %s436 = smul.addr %s433, 8
        %s437 = sadd.s32 %s435, %s436
        %s438 = smul.addr %s437, 4
        %s439 = scalar_lea.vmem %s2, %s438
        %s440 = sadd.s32 %s26, 1
        %s441 = smul.u32 %s440, 4
        %p442 = scmp.lt.s32.totalorder %s441, 7
        %s443 = scalar_select %p442, %s441, 7
      $region64: #{bottleneck_pallas.1} parent=51 // pred_fallthru
        _
    $region52: #{bottleneck_pallas.1} parent=5 // pred_fallthru
      _
    %p444 = scmp.le.s32.totalorder 1, %s18
    %p445 = scmp.lt.s32.totalorder %s18, 5
    %p446 = pnand %p444, %p445
    %p447 = pneg %p446
    // Predicated region
    $region65: #{bottleneck_pallas.1} parent=5 // pred_check
      _
    $region66: #{bottleneck_pallas.1} parent=5 // pred_check_branch
      %449 = sbr.rel (%p446) target = $region68
    $region67: #{bottleneck_pallas.1} parent=5 // pred_region
      %s450 = ssub.s32 %s18, 1
      %s451 = smul.u32 4, %s28
      %p452 = scmp.lt.s32.totalorder %s27, 1
      %s453 = scalar_select %p452, %s27, 1
      %p454 = scmp.lt.s32.totalorder %s451, 7
      %s455 = scalar_select %p454, %s451, 7
      %s456 = smul.addr %s453, 8
      %s457 = sadd.s32 %s455, %s456
      %s458 = smul.addr %s457, 4
      %s459 = scalar_lea.vmem %s0, %s458
      %p460 = pneg %p58
      %p461 = pneg %p55
      %s462 = smul.u32 %s28, 4
      %s463 = ssub.s32 %s462, 1
      %p464 = scmp.gt.s32.totalorder %s463, 0
      %s465 = scalar_select %p464, %s463, 0
      %p466 = scmp.lt.s32.totalorder %s27, 1
      %s467 = scalar_select %p466, %s27, 1
      %p468 = scmp.lt.s32.totalorder %s465, 7
      %s469 = scalar_select %p468, %s465, 7
      %s470 = smul.addr %s467, 8
      %s471 = sadd.s32 %s469, %s470
      %s472 = smul.addr %s471, 4
      %s473 = scalar_lea.vmem %s1, %s472
      %p474 = pneg %p94
      %p475 = pneg %p91
      %s476 = sadd.s32 %s28, 1
      %s477 = smul.u32 %s476, 4
      %p478 = scmp.lt.s32.totalorder %s477, 7
      %s479 = scalar_select %p478, %s477, 7
      %p480 = scmp.lt.s32.totalorder %s27, 1
      %s481 = scalar_select %p480, %s27, 1
      %p482 = scmp.lt.s32.totalorder %s479, 7
      %s483 = scalar_select %p482, %s479, 7
      %s484 = smul.addr %s481, 8
      %s485 = sadd.s32 %s483, %s484
      %s486 = smul.addr %s485, 4
      %s487 = scalar_lea.vmem %s2, %s486
      %p488 = pneg %p130
      %p489 = pneg %p127
      %p490 = pneg %p151
      %p491 = pneg %p148
      %p492 = pneg %p172
      %p493 = pneg %p169
      %p494 = pneg %p193
      %p495 = pneg %p190
      %p496 = pneg %p214
      %p497 = pneg %p211
      %p498 = pneg %p235
      %p499 = pneg %p232
      %p500 = pneg %p256
      %p501 = pneg %p253
      %p502 = pneg %p277
      %p503 = pneg %p274
      %p504 = pneg %p298
      %p505 = pneg %p295
      %p506 = pneg %p319
      %p507 = pneg %p316
      %p508 = pneg %p347
      %p509 = pneg %p344
      %s510 = smul.u32 4, %s28
      %p511 = scmp.lt.s32.totalorder %s27, 1
      %s512 = scalar_select %p511, %s27, 1
      %p513 = scmp.lt.s32.totalorder %s510, 7
      %s514 = scalar_select %p513, %s510, 7
      %s515 = smul.addr %s512, 8
      %s516 = sadd.s32 %s514, %s515
      %s517 = smul.addr %s516, 4
      %s518 = scalar_lea.vmem %s12, %s517
      %s519 = smul.u32 4, %s28
      %p520 = scmp.lt.s32.totalorder %s27, 1
      %s521 = scalar_select %p520, %s27, 1
      %p522 = scmp.lt.s32.totalorder %s519, 7
      %s523 = scalar_select %p522, %s519, 7
      %s524 = smul.addr %s521, 8
      %s525 = sadd.s32 %s523, %s524
      %s526 = smul.addr %s525, 4
      %s527 = scalar_lea.vmem %s0, %s526
      %s528 = smul.u32 4, %s28
      %s529 = smul.u32 %s28, 4
      %s530 = ssub.s32 %s529, 1
      %p531 = scmp.gt.s32.totalorder %s530, 0
      %s532 = scalar_select %p531, %s530, 0
      %p533 = scmp.lt.s32.totalorder %s27, 1
      %s534 = scalar_select %p533, %s27, 1
      %p535 = scmp.lt.s32.totalorder %s532, 7
      %s536 = scalar_select %p535, %s532, 7
      %s537 = smul.addr %s534, 8
      %s538 = sadd.s32 %s536, %s537
      %s539 = smul.addr %s538, 4
      %s540 = scalar_lea.vmem %s1, %s539
      %s541 = smul.u32 %s28, 4
      %s542 = ssub.s32 %s541, 1
      %p543 = scmp.gt.s32.totalorder %s542, 0
      %s544 = scalar_select %p543, %s542, 0
      %s545 = sadd.s32 %s28, 1
      %s546 = smul.u32 %s545, 4
      %p547 = scmp.lt.s32.totalorder %s546, 7
      %s548 = scalar_select %p547, %s546, 7
      %p549 = scmp.lt.s32.totalorder %s27, 1
      %s550 = scalar_select %p549, %s27, 1
      %p551 = scmp.lt.s32.totalorder %s548, 7
      %s552 = scalar_select %p551, %s548, 7
      %s553 = smul.addr %s550, 8
      %s554 = sadd.s32 %s552, %s553
      %s555 = smul.addr %s554, 4
      %s556 = scalar_lea.vmem %s2, %s555
      %s557 = sadd.s32 %s28, 1
      %s558 = smul.u32 %s557, 4
      %p559 = scmp.lt.s32.totalorder %s558, 7
      %s560 = scalar_select %p559, %s558, 7
      %s561 = smul.u32 4, %s28
      %p562 = scmp.lt.s32.totalorder %s27, 1
      %s563 = scalar_select %p562, %s27, 1
      %p564 = scmp.lt.s32.totalorder %s561, 7
      %s565 = scalar_select %p564, %s561, 7
      %s566 = smul.addr %s563, 8
      %s567 = sadd.s32 %s565, %s566
      %s568 = smul.addr %s567, 4
      %s569 = scalar_lea.vmem %s12, %s568
      %s570 = smul.u32 4, %s28
      %v572 = vld [vmem:[%s3] sm:$0xf]
      %v573 = vld [vmem:[%s3 + $0x4] sm:$0xf]
      %v574 = vld [vmem:[%s4] sm:$0x1]
      %v575 = vld [vmem:[%s5] sm:$0x1]
      %vm576 = vcmask 24576
      %vm577 = vsmask.f32 256
      %vm578 = vmand %vm576, %vm577
      %v579 = vld [vmem:[#allocation2] sm:$0x1]
      %v580 = vsel %vm578, 0, %v579
      %581 = vst [vmem:[#allocation2] sm:$0x1] %v580
      %v582 = vld [vmem:[#allocation2 + $0x8] sm:$0x1]
      %v583 = vsel %vm578, 0, %v582
      %584 = vst [vmem:[#allocation2 + $0x8] sm:$0x1] %v583
      %v585 = vld [vmem:[#allocation2 + $0x10] sm:$0x1]
      %v586 = vsel %vm578, 0, %v585
      %587 = vst [vmem:[#allocation2 + $0x10] sm:$0x1] %v586
      %v588 = vld [vmem:[#allocation2 + $0x18] sm:$0x1]
      %v589 = vsel %vm578, 0, %v588
      %590 = vst [vmem:[#allocation2 + $0x18] sm:$0x1] %v589
      %v591 = vld [vmem:[#allocation2 + $0x20] sm:$0x1]
      %v592 = vsel %vm578, 0, %v591
      %593 = vst [vmem:[#allocation2 + $0x20] sm:$0x1] %v592
      %v594 = vld [vmem:[#allocation2 + $0x28] sm:$0x1]
      %v595 = vsel %vm578, 0, %v594
      %596 = vst [vmem:[#allocation2 + $0x28] sm:$0x1] %v595
      %vm597 = vsmask.f32 7938
      %vm598 = vmand %vm576, %vm597
      %v599 = vld [vmem:[#allocation2 + $0x4] sm:$0x1]
      %v600 = vsel %vm598, 0, %v599
      %601 = vst [vmem:[#allocation2 + $0x4] sm:$0x1] %v600
      %v602 = vld [vmem:[#allocation2 + $0xc] sm:$0x1]
      %v603 = vsel %vm598, 0, %v602
      %604 = vst [vmem:[#allocation2 + $0xc] sm:$0x1] %v603
      %v605 = vld [vmem:[#allocation2 + $0x14] sm:$0x1]
      %v606 = vsel %vm598, 0, %v605
      %607 = vst [vmem:[#allocation2 + $0x14] sm:$0x1] %v606
      %v608 = vld [vmem:[#allocation2 + $0x1c] sm:$0x1]
      %v609 = vsel %vm598, 0, %v608
      %610 = vst [vmem:[#allocation2 + $0x1c] sm:$0x1] %v609
      %v611 = vld [vmem:[#allocation2 + $0x24] sm:$0x1]
      %v612 = vsel %vm598, 0, %v611
      %613 = vst [vmem:[#allocation2 + $0x24] sm:$0x1] %v612
      %v614 = vld [vmem:[#allocation2 + $0x2c] sm:$0x1]
      %v615 = vsel %vm598, 0, %v614
      %616 = vst [vmem:[#allocation2 + $0x2c] sm:$0x1] %v615
      %v617 = vld [vmem:[%s527] sm:$0xf]
      %v618 = vld [vmem:[%s527 + $0x4] sm:$0xf]
      %v619 = vld [vmem:[%s527 + $0x8] sm:$0xf]
      %v620 = vld [vmem:[%s527 + $0xc] sm:$0xf]
      %v625 = vunpack.c.l.b16 %v617
      %v626 = vunpack.c.l.b16 %v618
      %v627 = vunpack.c.l.b16 %v619
      %v628 = vunpack.c.l.b16 %v620
      %v629 = vpack.c.b16 %v626, %v625
      %v630 = vpack.c.b16 %v628, %v627
      %v633 = vunpack.c.l.b16 %v572
      %v634 = vunpack.c.l.b16 %v573
      %v635 = vpack.c.b16 %v634, %v633
      %vm637 = vcmask 130048
      %v639 = vsel %vm637, %v629, 0
      %v642 = vsel %vm637, %v630, 0
      %644 = vmatprep.subr.bf16.mxu0 0
      %645 = vmatpush1.bf16.msra.mxu0 %v635
      %646 = vmatprep.subr.bf16.mxu0 0
      %647 = vmatpush1.bf16.msra.mxu0 0
      %648 = vmatprep.subr.bf16.mxu0 0
      %649 = vmatpush1.bf16.msra.mxu0 0
      %650 = vmatprep.subr.bf16.mxu0 0
      %651 = vmatpush1.bf16.msra.mxu0 0
      %652 = vmatprep.subr.bf16.mxu0 0
      %653 = vmatpush1.bf16.msra.mxu0 0
      %654 = vmatprep.subr.bf16.mxu0 0
      %655 = vmatpush1.bf16.msra.mxu0 0
      %656 = vmatprep.subr.bf16.mxu0 0
      %657 = vmatpush1.bf16.msra.mxu0 0
      %658 = vmatprep.subr.bf16.mxu0 0
      %659 = vmatpush1.bf16.msra.mxu0 0
      %660 = vmatprep.subr.bf16.mxu0 0
      %661 = vmatpush1.bf16.msra.mxu0 0
      %662 = vmatprep.subr.bf16.mxu0 0
      %663 = vmatpush1.bf16.msra.mxu0 0
      %664 = vmatprep.subr.bf16.mxu0 0
      %665 = vmatpush1.bf16.msra.mxu0 0
      %666 = vmatprep.subr.bf16.mxu0 0
      %667 = vmatpush1.bf16.msra.mxu0 0
      %668 = vmatprep.subr.bf16.mxu0 0
      %669 = vmatpush1.bf16.msra.mxu0 0
      %670 = vmatprep.subr.bf16.mxu0 0
      %671 = vmatpush1.bf16.msra.mxu0 0
      %672 = vmatprep.subr.bf16.mxu0 0
      %673 = vmatpush1.bf16.msra.mxu0 0
      %674 = vmatprep.subr.bf16.mxu0 0
      %675 = vmatpush1.bf16.msra.mxu0 0
      %676 = vmatprep.mubr.bf16.mxu0 0
      %677 = vmatmul.mubr.bf16.gmra.mrb[0].mxu0 %v639
      %v678 = vpop.f32.mrb[0].mxu0
      %v679 = vadd.f32 0.0, %v678
      %v680 = vpop.f32.mrb[0].mxu0
      %v681 = vpop.f32.mrb[0].mxu0
      %v682 = vadd.f32 0.0, %v681
      %v683 = vpop.f32.mrb[0].mxu0
      %684 = vmatprep.mubr.bf16.mxu0 0
      %685 = vmatmul.mubr.bf16.gmra.mrb[0].mxu0 %v642
      %v686 = vpop.f32.mrb[0].mxu0
      %v687 = vadd.f32 0.0, %v686
      %v688 = vpop.f32.mrb[0].mxu0
      %v689 = vpop.f32.mrb[0].mxu0
      %v690 = vadd.f32 0.0, %v689
      %v691 = vpop.f32.mrb[0].mxu0
      %692 = vdwg.mxu0
      %v694 = vlaneseq
      %v695 = vshrl.u32 %v694, 7
      %v696 = vsub.s32 0, %v695
      %v697 = vrot.slane %v574, %v696
      %v699 = vmul.f32 %v679, %v697
      %v700 = vmul.f32 %v682, %v697
      %v701 = vmul.f32 %v687, %v697
      %v702 = vmul.f32 %v690, %v697
      %v704 = vlaneseq
      %v705 = vshrl.u32 %v704, 7
      %v706 = vsub.s32 0, %v705
      %v707 = vrot.slane %v575, %v706
      %v709 = vadd.f32 %v699, %v707
      %v710 = vadd.f32 %v700, %v707
      %v711 = vadd.f32 %v701, %v707
      %v712 = vadd.f32 %v702, %v707
      %v713 = vmax.f32 %v709, 0.0
      %v714 = vmax.f32 %v710, 0.0
      %v715 = vmax.f32 %v711, 0.0
      %v716 = vmax.f32 %v712, 0.0
      %v717 = vpack.c.bf16 %v714, %v713
      %v718 = vpack.c.bf16 %v716, %v715
      %v721 = vunpack.c.l.b16 %v717
      %v722 = vunpack.c.h.b16 %v717
      %v723 = vunpack.c.l.b16 %v718
      %v724 = vunpack.c.h.b16 %v718
      %v725 = vpack.c.b16 %v721, %v721
      %v726 = vpack.c.b16 %v722, %v722
      %v727 = vpack.c.b16 %v723, %v723
      %v728 = vpack.c.b16 %v724, %v724
      %v730 = vshrl.u32 %v725, 16
      %v732 = vrot.slane %v730, 7
      %v733 = vshll.u32 %v725, 16
      %v735 = vor.u32 %v732, %v733
      %v736 = vrot.slane %v732, 4
      %v738 = vshrl.u32 %v726, 16
      %v740 = vrot.slane %v738, 7
      %v741 = vshll.u32 %v726, 16
      %v743 = vor.u32 %v740, %v741
      %v744 = vrot.slane %v740, 4
      %v746 = vshrl.u32 %v727, 16
      %v748 = vrot.slane %v746, 7
      %v749 = vshll.u32 %v727, 16
      %v751 = vor.u32 %v748, %v749
      %v752 = vrot.slane %v748, 4
      %v754 = vshrl.u32 %v728, 16
      %v756 = vrot.slane %v754, 7
      %v757 = vshll.u32 %v728, 16
      %v759 = vor.u32 %v756, %v757
      %v760 = vrot.slane %v756, 4
      %s769 = scalar_lea.vmem [#allocation2], 8
      %vm770 = vcmask 27648
      %vm771 = vmand %vm770, %vm597
      %v772 = vld [vmem:[%s769] sm:$0xf]
      %v773 = vsel %vm771, %v735, %v772
      %774 = vst [vmem:[%s769] sm:$0xf] %v773
      %v775 = vld [vmem:[%s769 + $0x4] sm:$0x1]
      %v776 = vsel %vm578, %v736, %v775
      %777 = vst [vmem:[%s769 + $0x4] sm:$0x1] %v776
      %v778 = vld [vmem:[%s769 + $0x8] sm:$0xf]
      %v779 = vsel %vm771, %v743, %v778
      %780 = vst [vmem:[%s769 + $0x8] sm:$0xf] %v779
      %v781 = vld [vmem:[%s769 + $0xc] sm:$0x1]
      %v782 = vsel %vm578, %v744, %v781
      %783 = vst [vmem:[%s769 + $0xc] sm:$0x1] %v782
      %v784 = vld [vmem:[%s769 + $0x10] sm:$0xf]
      %v785 = vsel %vm771, %v751, %v784
      %786 = vst [vmem:[%s769 + $0x10] sm:$0xf] %v785
      %v787 = vld [vmem:[%s769 + $0x14] sm:$0x1]
      %v788 = vsel %vm578, %v752, %v787
      %789 = vst [vmem:[%s769 + $0x14] sm:$0x1] %v788
      %v790 = vld [vmem:[%s769 + $0x18] sm:$0xf]
      %v791 = vsel %vm771, %v759, %v790
      %792 = vst [vmem:[%s769 + $0x18] sm:$0xf] %v791
      %v793 = vld [vmem:[%s769 + $0x1c] sm:$0x1]
      %v794 = vsel %vm578, %v760, %v793
      %795 = vst [vmem:[%s769 + $0x1c] sm:$0x1] %v794
      %p796 = scmp.gt.s32.totalorder %s28, 0
      // Predicated region
      $region69: #{bottleneck_pallas.1} parent=67 // pred_check
        %p797 = pneg %p796
      $region70: #{bottleneck_pallas.1} parent=67 // pred_check_branch
        %799 = sbr.rel (%p797) target = $region72
      $region71: #{bottleneck_pallas.1} parent=67 // pred_region
        %v800 = vld [vmem:[%s540] sm:$0xf]
        %v802 = vsel %vm637, %v800, 0
        %804 = vmatprep.subr.bf16.mxu0 0
        %805 = vmatpush1.bf16.msra.mxu0 %v635
        %806 = vmatprep.subr.bf16.mxu0 0
        %807 = vmatpush1.bf16.msra.mxu0 0
        %808 = vmatprep.subr.bf16.mxu0 0
        %809 = vmatpush1.bf16.msra.mxu0 0
        %810 = vmatprep.subr.bf16.mxu0 0
        %811 = vmatpush1.bf16.msra.mxu0 0
        %812 = vmatprep.subr.bf16.mxu0 0
        %813 = vmatpush1.bf16.msra.mxu0 0
        %814 = vmatprep.subr.bf16.mxu0 0
        %815 = vmatpush1.bf16.msra.mxu0 0
        %816 = vmatprep.subr.bf16.mxu0 0
        %817 = vmatpush1.bf16.msra.mxu0 0
        %818 = vmatprep.subr.bf16.mxu0 0
        %819 = vmatpush1.bf16.msra.mxu0 0
        %820 = vmatprep.subr.bf16.mxu0 0
        %821 = vmatpush1.bf16.msra.mxu0 0
        %822 = vmatprep.subr.bf16.mxu0 0
        %823 = vmatpush1.bf16.msra.mxu0 0
        %824 = vmatprep.subr.bf16.mxu0 0
        %825 = vmatpush1.bf16.msra.mxu0 0
        %826 = vmatprep.subr.bf16.mxu0 0
        %827 = vmatpush1.bf16.msra.mxu0 0
        %828 = vmatprep.subr.bf16.mxu0 0
        %829 = vmatpush1.bf16.msra.mxu0 0
        %830 = vmatprep.subr.bf16.mxu0 0
        %831 = vmatpush1.bf16.msra.mxu0 0
        %832 = vmatprep.subr.bf16.mxu0 0
        %833 = vmatpush1.bf16.msra.mxu0 0
        %834 = vmatprep.subr.bf16.mxu0 0
        %835 = vmatpush1.bf16.msra.mxu0 0
        %836 = vmatprep.mubr.bf16.mxu0 0
        %837 = vmatmul.mubr.bf16.gmra.mrb[0].mxu0 %v802
        %v838 = vpop.f32.mrb[0].mxu0
        %v839 = vadd.f32 0.0, %v838
        %v840 = vpop.f32.mrb[0].mxu0
        %v841 = vpop.f32.mrb[0].mxu0
        %v842 = vpop.f32.mrb[0].mxu0
        %843 = vdwg.mxu0
        %v844 = vmul.f32 %v839, %v697
        %v845 = vadd.f32 %v844, %v707
        %v846 = vmax.f32 %v845, 0.0
        %v847 = vpack.c.bf16 %v846, %v846
        %v849 = vunpack.c.l.b16 %v847
        %v850 = vpack.c.b16 %v849, %v849
        %v852 = vshrl.u32 %v850, 16
        %v854 = vrot.slane %v852, 7
        %v855 = vshll.u32 %v850, 16
        %v857 = vor.u32 %v854, %v855
        %v858 = vrot.slane %v854, 4
        %v861 = vld [vmem:[#allocation2] sm:$0xf]
        %v862 = vsel %vm771, %v857, %v861
        %863 = vst [vmem:[#allocation2] sm:$0xf] %v862
        %v864 = vld [vmem:[#allocation2 + $0x4] sm:$0x1]
        %v865 = vsel %vm578, %v858, %v864
        %866 = vst [vmem:[#allocation2 + $0x4] sm:$0x1] %v865
      $region72: #{bottleneck_pallas.1} parent=67 // pred_fallthru
        _
      %p867 = scmp.eq.s32.totalorder %s28, 0
      // Predicated region
      $region73: #{bottleneck_pallas.1} parent=67 // pred_check
        %p868 = pneg %p867
      $region74: #{bottleneck_pallas.1} parent=67 // pred_check_branch
        %870 = sbr.rel (%p868) target = $region76
      $region75: #{bottleneck_pallas.1} parent=67 // pred_region
        %v871 = vld [vmem:[#allocation2] sm:$0xf]
        %v872 = vsel %vm771, 0, %v871
        %873 = vst [vmem:[#allocation2] sm:$0xf] %v872
        %v874 = vld [vmem:[#allocation2 + $0x4] sm:$0x1]
        %v875 = vsel %vm578, 0, %v874
        %876 = vst [vmem:[#allocation2 + $0x4] sm:$0x1] %v875
      $region76: #{bottleneck_pallas.1} parent=67 // pred_fallthru
        _
      %p877 = scmp.lt.s32.totalorder %s28, 1
      // Predicated region
      $region77: #{bottleneck_pallas.1} parent=67 // pred_check
        %p878 = pneg %p877
      $region78: #{bottleneck_pallas.1} parent=67 // pred_check_branch
        %880 = sbr.rel (%p878) target = $region80
      $region79: #{bottleneck_pallas.1} parent=67 // pred_region
        %v881 = vld [vmem:[%s556] sm:$0xf]
        %v883 = vsel %vm637, %v881, 0
        %885 = vmatprep.subr.bf16.mxu0 0
        %886 = vmatpush1.bf16.msra.mxu0 %v635
        %887 = vmatprep.subr.bf16.mxu0 0
        %888 = vmatpush1.bf16.msra.mxu0 0
        %889 = vmatprep.subr.bf16.mxu0 0
        %890 = vmatpush1.bf16.msra.mxu0 0
        %891 = vmatprep.subr.bf16.mxu0 0
        %892 = vmatpush1.bf16.msra.mxu0 0
        %893 = vmatprep.subr.bf16.mxu0 0
        %894 = vmatpush1.bf16.msra.mxu0 0
        %895 = vmatprep.subr.bf16.mxu0 0
        %896 = vmatpush1.bf16.msra.mxu0 0
        %897 = vmatprep.subr.bf16.mxu0 0
        %898 = vmatpush1.bf16.msra.mxu0 0
        %899 = vmatprep.subr.bf16.mxu0 0
        %900 = vmatpush1.bf16.msra.mxu0 0
        %901 = vmatprep.subr.bf16.mxu0 0
        %902 = vmatpush1.bf16.msra.mxu0 0
        %903 = vmatprep.subr.bf16.mxu0 0
        %904 = vmatpush1.bf16.msra.mxu0 0
        %905 = vmatprep.subr.bf16.mxu0 0
        %906 = vmatpush1.bf16.msra.mxu0 0
        %907 = vmatprep.subr.bf16.mxu0 0
        %908 = vmatpush1.bf16.msra.mxu0 0
        %909 = vmatprep.subr.bf16.mxu0 0
        %910 = vmatpush1.bf16.msra.mxu0 0
        %911 = vmatprep.subr.bf16.mxu0 0
        %912 = vmatpush1.bf16.msra.mxu0 0
        %913 = vmatprep.subr.bf16.mxu0 0
        %914 = vmatpush1.bf16.msra.mxu0 0
        %915 = vmatprep.subr.bf16.mxu0 0
        %916 = vmatpush1.bf16.msra.mxu0 0
        %917 = vmatprep.mubr.bf16.mxu0 0
        %918 = vmatmul.mubr.bf16.gmra.mrb[0].mxu0 %v883
        %v919 = vpop.f32.mrb[0].mxu0
        %v920 = vadd.f32 0.0, %v919
        %v921 = vpop.f32.mrb[0].mxu0
        %v922 = vpop.f32.mrb[0].mxu0
        %v923 = vpop.f32.mrb[0].mxu0
        %924 = vdwg.mxu0
        %v925 = vmul.f32 %v920, %v697
        %v926 = vadd.f32 %v925, %v707
        %v927 = vmax.f32 %v926, 0.0
        %v928 = vpack.c.bf16 %v927, %v927
        %v930 = vunpack.c.l.b16 %v928
        %v931 = vpack.c.b16 %v930, %v930
        %v933 = vshrl.u32 %v931, 16
        %v935 = vrot.slane %v933, 7
        %v936 = vshll.u32 %v931, 16
        %v938 = vor.u32 %v935, %v936
        %v939 = vrot.slane %v935, 4
        %s942 = scalar_lea.vmem [#allocation2], 40
        %v943 = vld [vmem:[%s942] sm:$0xf]
        %v944 = vsel %vm771, %v938, %v943
        %945 = vst [vmem:[%s942] sm:$0xf] %v944
        %v946 = vld [vmem:[%s942 + $0x4] sm:$0x1]
        %v947 = vsel %vm578, %v939, %v946
        %948 = vst [vmem:[%s942 + $0x4] sm:$0x1] %v947
      $region80: #{bottleneck_pallas.1} parent=67 // pred_fallthru
        _
      %p949 = scmp.eq.s32.totalorder %s28, 1
      // Predicated region
      $region81: #{bottleneck_pallas.1} parent=67 // pred_check
        %p950 = pneg %p949
      $region82: #{bottleneck_pallas.1} parent=67 // pred_check_branch
        %952 = sbr.rel (%p950) target = $region84
      $region83: #{bottleneck_pallas.1} parent=67 // pred_region
        %s953 = scalar_lea.vmem [#allocation2], 40
        %v954 = vld [vmem:[%s953] sm:$0xf]
        %v955 = vsel %vm771, 0, %v954
        %956 = vst [vmem:[%s953] sm:$0xf] %v955
        %v957 = vld [vmem:[%s953 + $0x4] sm:$0x1]
        %v958 = vsel %vm578, 0, %v957
        %959 = vst [vmem:[%s953 + $0x4] sm:$0x1] %v958
      $region84: #{bottleneck_pallas.1} parent=67 // pred_fallthru
        _
      %v960 = vld [vmem:[%s7] sm:$0x1]
      %v961 = vld [vmem:[%s8] sm:$0x1]
      %v962 = vld [vmem:[%s9] sm:$0x3]
      %v963 = vld [vmem:[%s10] sm:$0x1]
      %v964 = vld [vmem:[%s11] sm:$0x1]
      %v965 = vld [vmem:[#allocation2] sm:$0xf]
      %v966 = vld [vmem:[#allocation2 + $0x8] sm:$0xf]
      %v967 = vld [vmem:[#allocation2 + $0x10] sm:$0xf]
      %v968 = vld [vmem:[#allocation2 + $0x18] sm:$0xf]
      %v969 = vld [vmem:[#allocation2 + $0x4] sm:$0x1]
      %v970 = vld [vmem:[#allocation2 + $0xc] sm:$0x1]
      %v971 = vld [vmem:[#allocation2 + $0x14] sm:$0x1]
      %v972 = vld [vmem:[#allocation2 + $0x1c] sm:$0x1]
      %v973 = vld [vmem:[#allocation2] sm:$0xe]
      %v974 = vld [vmem:[#allocation2 + $0x8] sm:$0xe]
      %v975 = vld [vmem:[#allocation2 + $0x10] sm:$0xe]
      %v976 = vld [vmem:[#allocation2 + $0x18] sm:$0xe]
      %v985 = vunpack.c.l.b16 %v965
      %v986 = vunpack.c.l.b16 %v969
      %v987 = vunpack.c.l.b16 %v966
      %v988 = vunpack.c.l.b16 %v970
      %v989 = vunpack.c.l.b16 %v967
      %v990 = vunpack.c.l.b16 %v971
      %v991 = vunpack.c.l.b16 %v968
      %v992 = vunpack.c.l.b16 %v972
      %v993 = vpack.c.b16 %v986, %v985
      %v994 = vpack.c.b16 %v988, %v987
      %v995 = vpack.c.b16 %v990, %v989
      %v996 = vpack.c.b16 %v992, %v991
      %v998 = vshrl.u32 %v993, 16
      %v1000 = vshll.u32 %v993, 16
      %v1002 = vrot.slane %v1000, 1
      %v1003 = vor.u32 %v998, %v1002
      %v1005 = vshrl.u32 %v994, 16
      %v1007 = vshll.u32 %v994, 16
      %v1009 = vrot.slane %v1007, 1
      %v1010 = vor.u32 %v1005, %v1009
      %v1012 = vshrl.u32 %v995, 16
      %v1014 = vshll.u32 %v995, 16
      %v1016 = vrot.slane %v1014, 1
      %v1017 = vor.u32 %v1012, %v1016
      %v1019 = vshrl.u32 %v996, 16
      %v1021 = vshll.u32 %v996, 16
      %v1023 = vrot.slane %v1021, 1
      %v1024 = vor.u32 %v1019, %v1023
      %1025 = vrot.lane.b32.xlu0 %v1003, 4
      %v1026 = vpop.permute.xlu0 %1025
      %1027 = vrot.lane.b32.xlu0 %v1010, 4
      %v1028 = vpop.permute.xlu0 %1027
      %1029 = vrot.lane.b32.xlu0 %v1017, 4
      %v1030 = vpop.permute.xlu0 %1029
      %1031 = vrot.lane.b32.xlu0 %v1024, 4
      %v1032 = vpop.permute.xlu0 %1031
      %v1037 = vunpack.c.l.b16 %v973
      %v1038 = vunpack.c.l.b16 %v974
      %v1039 = vunpack.c.l.b16 %v975
      %v1040 = vunpack.c.l.b16 %v976
      %v1041 = vpack.c.b16 %v986, %v1037
      %v1042 = vpack.c.b16 %v988, %v1038
      %v1043 = vpack.c.b16 %v990, %v1039
      %v1044 = vpack.c.b16 %v992, %v1040
      %v1045 = vrot.slane %v1041, 1
      %v1046 = vrot.slane %v1042, 1
      %v1047 = vrot.slane %v1043, 1
      %v1048 = vrot.slane %v1044, 1
      %1049 = vrot.lane.b32.xlu0 %v1045, 8
      %v1050 = vpop.permute.xlu0 %1049
      %1051 = vrot.lane.b32.xlu0 %v1046, 8
      %v1052 = vpop.permute.xlu0 %1051
      %1053 = vrot.lane.b32.xlu0 %v1047, 8
      %v1054 = vpop.permute.xlu0 %1053
      %1055 = vrot.lane.b32.xlu0 %v1048, 8
      %v1056 = vpop.permute.xlu0 %1055
      %vm1057 = vcmask 31744
      %v1060 = vsel %vm1057, %v965, %v1026
      %v1063 = vsel %vm1057, %v966, %v1028
      %v1066 = vsel %vm1057, %v967, %v1030
      %v1069 = vsel %vm1057, %v968, %v1032
      %vm1070 = vcmask 64512
      %v1072 = vsel %vm1070, %v1060, %v1050
      %v1074 = vsel %vm1070, %v1063, %v1052
      %v1076 = vsel %vm1070, %v1066, %v1054
      %v1078 = vsel %vm1070, %v1069, %v1056
      %v1079 = vld [vmem:[%s6] sm:$0xf]
      %v1080 = vld [vmem:[%s6 + $0x4] sm:$0x3]
      %v1081 = vld [vmem:[%s769] sm:$0xf]
      %v1082 = vld [vmem:[%s769 + $0x8] sm:$0xf]
      %v1083 = vld [vmem:[%s769 + $0x10] sm:$0xf]
      %v1084 = vld [vmem:[%s769 + $0x18] sm:$0xf]
      %v1085 = vld [vmem:[%s769 + $0x4] sm:$0x1]
      %v1086 = vld [vmem:[%s769 + $0xc] sm:$0x1]
      %v1087 = vld [vmem:[%s769 + $0x14] sm:$0x1]
      %v1088 = vld [vmem:[%s769 + $0x1c] sm:$0x1]
      %v1089 = vld [vmem:[%s769] sm:$0xe]
      %v1090 = vld [vmem:[%s769 + $0x8] sm:$0xe]
      %v1091 = vld [vmem:[%s769 + $0x10] sm:$0xe]
      %v1092 = vld [vmem:[%s769 + $0x18] sm:$0xe]
      %v1101 = vunpack.c.l.b16 %v1081
      %v1102 = vunpack.c.l.b16 %v1085
      %v1103 = vunpack.c.l.b16 %v1082
      %v1104 = vunpack.c.l.b16 %v1086
      %v1105 = vunpack.c.l.b16 %v1083
      %v1106 = vunpack.c.l.b16 %v1087
      %v1107 = vunpack.c.l.b16 %v1084
      %v1108 = vunpack.c.l.b16 %v1088
      %v1109 = vpack.c.b16 %v1102, %v1101
      %v1110 = vpack.c.b16 %v1104, %v1103
      %v1111 = vpack.c.b16 %v1106, %v1105
      %v1112 = vpack.c.b16 %v1108, %v1107
      %v1114 = vshrl.u32 %v1109, 16
      %v1116 = vshll.u32 %v1109, 16
      %v1118 = vrot.slane %v1116, 1
      %v1119 = vor.u32 %v1114, %v1118
      %v1121 = vshrl.u32 %v1110, 16
      %v1123 = vshll.u32 %v1110, 16
      %v1125 = vrot.slane %v1123, 1
      %v1126 = vor.u32 %v1121, %v1125
      %v1128 = vshrl.u32 %v1111, 16
      %v1130 = vshll.u32 %v1111, 16
      %v1132 = vrot.slane %v1130, 1
      %v1133 = vor.u32 %v1128, %v1132
      %v1135 = vshrl.u32 %v1112, 16
      %v1137 = vshll.u32 %v1112, 16
      %v1139 = vrot.slane %v1137, 1
      %v1140 = vor.u32 %v1135, %v1139
      %1141 = vrot.lane.b32.xlu0 %v1119, 4
      %v1142 = vpop.permute.xlu0 %1141
      %1143 = vrot.lane.b32.xlu0 %v1126, 4
      %v1144 = vpop.permute.xlu0 %1143
      %1145 = vrot.lane.b32.xlu0 %v1133, 4
      %v1146 = vpop.permute.xlu0 %1145
      %1147 = vrot.lane.b32.xlu0 %v1140, 4
      %v1148 = vpop.permute.xlu0 %1147
      %v1153 = vunpack.c.l.b16 %v1089
      %v1154 = vunpack.c.l.b16 %v1090
      %v1155 = vunpack.c.l.b16 %v1091
      %v1156 = vunpack.c.l.b16 %v1092
      %v1157 = vpack.c.b16 %v1102, %v1153
      %v1158 = vpack.c.b16 %v1104, %v1154
      %v1159 = vpack.c.b16 %v1106, %v1155
      %v1160 = vpack.c.b16 %v1108, %v1156
      %v1161 = vrot.slane %v1157, 1
      %v1162 = vrot.slane %v1158, 1
      %v1163 = vrot.slane %v1159, 1
      %v1164 = vrot.slane %v1160, 1
      %1165 = vrot.lane.b32.xlu0 %v1161, 8
      %v1166 = vpop.permute.xlu0 %1165
      %1167 = vrot.lane.b32.xlu0 %v1162, 8
      %v1168 = vpop.permute.xlu0 %1167
      %1169 = vrot.lane.b32.xlu0 %v1163, 8
      %v1170 = vpop.permute.xlu0 %1169
      %1171 = vrot.lane.b32.xlu0 %v1164, 8
      %v1172 = vpop.permute.xlu0 %1171
      %v1175 = vsel %vm1057, %v1081, %v1142
      %v1178 = vsel %vm1057, %v1082, %v1144
      %v1181 = vsel %vm1057, %v1083, %v1146
      %v1184 = vsel %vm1057, %v1084, %v1148
      %v1186 = vsel %vm1070, %v1175, %v1166
      %v1188 = vsel %vm1070, %v1178, %v1168
      %v1190 = vsel %vm1070, %v1181, %v1170
      %v1192 = vsel %vm1070, %v1184, %v1172
      %s1193 = scalar_lea.vmem %s6, 8
      %v1194 = vld [vmem:[%s1193] sm:$0xf]
      %v1195 = vld [vmem:[%s1193 + $0x4] sm:$0x3]
      %v1200 = vunpack.c.l.b16 %v1186
      %v1201 = vunpack.c.l.b16 %v1188
      %v1202 = vunpack.c.l.b16 %v1190
      %v1203 = vunpack.c.l.b16 %v1192
      %v1204 = vpack.c.b16 %v1201, %v1200
      %v1205 = vpack.c.b16 %v1203, %v1202
      %v1208 = vunpack.c.l.b16 %v1194
      %v1209 = vunpack.c.l.b16 %v1195
      %v1210 = vpack.c.b16 %v1209, %v1208
      %vm1211 = vcmask 97280
      %v1213 = vsel %vm1211, %v1204, 0
      %v1216 = vsel %vm1211, %v1205, 0
      %vm1218 = vcmask 1045504
      %v1220 = vsel %vm1218, %v1210, 0
      %1222 = vmatprep.subr.bf16.mxu0 0
      %1223 = vmatpush1.bf16.msra.mxu0 %v1220
      %1224 = vmatprep.subr.bf16.mxu0 0
      %1225 = vmatpush1.bf16.msra.mxu0 0
      %1226 = vmatprep.subr.bf16.mxu0 0
      %1227 = vmatpush1.bf16.msra.mxu0 0
      %1228 = vmatprep.subr.bf16.mxu0 0
      %1229 = vmatpush1.bf16.msra.mxu0 0
      %1230 = vmatprep.subr.bf16.mxu0 0
      %1231 = vmatpush1.bf16.msra.mxu0 0
      %1232 = vmatprep.subr.bf16.mxu0 0
      %1233 = vmatpush1.bf16.msra.mxu0 0
      %1234 = vmatprep.subr.bf16.mxu0 0
      %1235 = vmatpush1.bf16.msra.mxu0 0
      %1236 = vmatprep.subr.bf16.mxu0 0
      %1237 = vmatpush1.bf16.msra.mxu0 0
      %1238 = vmatprep.subr.bf16.mxu0 0
      %1239 = vmatpush1.bf16.msra.mxu0 0
      %1240 = vmatprep.subr.bf16.mxu0 0
      %1241 = vmatpush1.bf16.msra.mxu0 0
      %1242 = vmatprep.subr.bf16.mxu0 0
      %1243 = vmatpush1.bf16.msra.mxu0 0
      %1244 = vmatprep.subr.bf16.mxu0 0
      %1245 = vmatpush1.bf16.msra.mxu0 0
      %1246 = vmatprep.subr.bf16.mxu0 0
      %1247 = vmatpush1.bf16.msra.mxu0 0
      %1248 = vmatprep.subr.bf16.mxu0 0
      %1249 = vmatpush1.bf16.msra.mxu0 0
      %1250 = vmatprep.subr.bf16.mxu0 0
      %1251 = vmatpush1.bf16.msra.mxu0 0
      %1252 = vmatprep.subr.bf16.mxu0 0
      %1253 = vmatpush1.bf16.msra.mxu0 0
      %1254 = vmatprep.mubr.bf16.mxu0 0
      %1255 = vmatmul.mubr.bf16.gmra.mrb[0].mxu0 %v1213
      %v1256 = vpop.f32.mrb[0].mxu0
      %v1257 = vadd.f32 0.0, %v1256
      %v1258 = vpop.f32.mrb[0].mxu0
      %v1259 = vpop.f32.mrb[0].mxu0
      %v1260 = vadd.f32 0.0, %v1259
      %v1261 = vpop.f32.mrb[0].mxu0
      %1262 = vmatprep.mubr.bf16.mxu0 0
      %1263 = vmatmul.mubr.bf16.gmra.mrb[0].mxu0 %v1216
      %v1264 = vpop.f32.mrb[0].mxu0
      %v1265 = vadd.f32 0.0, %v1264
      %v1266 = vpop.f32.mrb[0].mxu0
      %v1267 = vpop.f32.mrb[0].mxu0
      %v1268 = vadd.f32 0.0, %v1267
      %v1269 = vpop.f32.mrb[0].mxu0
      %1270 = vdwg.mxu0
      %v1275 = vunpack.c.l.b16 %v1072
      %v1276 = vunpack.c.l.b16 %v1074
      %v1277 = vunpack.c.l.b16 %v1076
      %v1278 = vunpack.c.l.b16 %v1078
      %v1279 = vpack.c.b16 %v1276, %v1275
      %v1280 = vpack.c.b16 %v1278, %v1277
      %v1283 = vunpack.c.l.b16 %v1079
      %v1284 = vunpack.c.l.b16 %v1080
      %v1285 = vpack.c.b16 %v1284, %v1283
      %v1287 = vsel %vm1211, %v1279, 0
      %v1290 = vsel %vm1211, %v1280, 0
      %v1293 = vsel %vm1218, %v1285, 0
      %1295 = vmatprep.subr.bf16.mxu0 0
      %1296 = vmatpush1.bf16.msra.mxu0 %v1293
      %1297 = vmatprep.subr.bf16.mxu0 0
      %1298 = vmatpush1.bf16.msra.mxu0 0
      %1299 = vmatprep.subr.bf16.mxu0 0
      %1300 = vmatpush1.bf16.msra.mxu0 0
      %1301 = vmatprep.subr.bf16.mxu0 0
      %1302 = vmatpush1.bf16.msra.mxu0 0
      %1303 = vmatprep.subr.bf16.mxu0 0
      %1304 = vmatpush1.bf16.msra.mxu0 0
      %1305 = vmatprep.subr.bf16.mxu0 0
      %1306 = vmatpush1.bf16.msra.mxu0 0
      %1307 = vmatprep.subr.bf16.mxu0 0
      %1308 = vmatpush1.bf16.msra.mxu0 0
      %1309 = vmatprep.subr.bf16.mxu0 0
      %1310 = vmatpush1.bf16.msra.mxu0 0
      %1311 = vmatprep.subr.bf16.mxu0 0
      %1312 = vmatpush1.bf16.msra.mxu0 0
      %1313 = vmatprep.subr.bf16.mxu0 0
      %1314 = vmatpush1.bf16.msra.mxu0 0
      %1315 = vmatprep.subr.bf16.mxu0 0
      %1316 = vmatpush1.bf16.msra.mxu0 0
      %1317 = vmatprep.subr.bf16.mxu0 0
      %1318 = vmatpush1.bf16.msra.mxu0 0
      %1319 = vmatprep.subr.bf16.mxu0 0
      %1320 = vmatpush1.bf16.msra.mxu0 0
      %1321 = vmatprep.subr.bf16.mxu0 0
      %1322 = vmatpush1.bf16.msra.mxu0 0
      %1323 = vmatprep.subr.bf16.mxu0 0
      %1324 = vmatpush1.bf16.msra.mxu0 0
      %1325 = vmatprep.subr.bf16.mxu0 0
      %1326 = vmatpush1.bf16.msra.mxu0 0
      %1327 = vmatprep.mubr.bf16.mxu0 0
      %1328 = vmatmul.mubr.bf16.gmra.mrb[0].mxu0 %v1287
      %v1329 = vpop.f32.mrb[0].mxu0
      %v1330 = vadd.f32 %v1257, %v1329
      %v1331 = vpop.f32.mrb[0].mxu0
      %v1332 = vpop.f32.mrb[0].mxu0
      %v1333 = vadd.f32 %v1260, %v1332
      %v1334 = vpop.f32.mrb[0].mxu0
      %1335 = vmatprep.mubr.bf16.mxu0 0
      %1336 = vmatmul.mubr.bf16.gmra.mrb[0].mxu0 %v1290
      %v1337 = vpop.f32.mrb[0].mxu0
      %v1338 = vadd.f32 %v1265, %v1337
      %v1339 = vpop.f32.mrb[0].mxu0
      %v1340 = vpop.f32.mrb[0].mxu0
      %v1341 = vadd.f32 %v1268, %v1340
      %v1342 = vpop.f32.mrb[0].mxu0
      %1343 = vdwg.mxu0
      %s1344 = scalar_lea.vmem [#allocation2], 16
      %v1345 = vld [vmem:[%s1344] sm:$0xf]
      %v1346 = vld [vmem:[%s1344 + $0x8] sm:$0xf]
      %v1347 = vld [vmem:[%s1344 + $0x10] sm:$0xf]
      %v1348 = vld [vmem:[%s1344 + $0x18] sm:$0xf]
      %v1349 = vld [vmem:[%s1344 + $0x4] sm:$0x1]
      %v1350 = vld [vmem:[%s1344 + $0xc] sm:$0x1]
      %v1351 = vld [vmem:[%s1344 + $0x14] sm:$0x1]
      %v1352 = vld [vmem:[%s1344 + $0x1c] sm:$0x1]
      %v1353 = vld [vmem:[%s1344] sm:$0xe]
      %v1354 = vld [vmem:[%s1344 + $0x8] sm:$0xe]
      %v1355 = vld [vmem:[%s1344 + $0x10] sm:$0xe]
      %v1356 = vld [vmem:[%s1344 + $0x18] sm:$0xe]
      %v1365 = vunpack.c.l.b16 %v1345
      %v1366 = vunpack.c.l.b16 %v1349
      %v1367 = vunpack.c.l.b16 %v1346
      %v1368 = vunpack.c.l.b16 %v1350
      %v1369 = vunpack.c.l.b16 %v1347
      %v1370 = vunpack.c.l.b16 %v1351
      %v1371 = vunpack.c.l.b16 %v1348
      %v1372 = vunpack.c.l.b16 %v1352
      %v1373 = vpack.c.b16 %v1366, %v1365
      %v1374 = vpack.c.b16 %v1368, %v1367
      %v1375 = vpack.c.b16 %v1370, %v1369
      %v1376 = vpack.c.b16 %v1372, %v1371
      %v1378 = vshrl.u32 %v1373, 16
      %v1380 = vshll.u32 %v1373, 16
      %v1382 = vrot.slane %v1380, 1
      %v1383 = vor.u32 %v1378, %v1382
      %v1385 = vshrl.u32 %v1374, 16
      %v1387 = vshll.u32 %v1374, 16
      %v1389 = vrot.slane %v1387, 1
      %v1390 = vor.u32 %v1385, %v1389
      %v1392 = vshrl.u32 %v1375, 16
      %v1394 = vshll.u32 %v1375, 16
      %v1396 = vrot.slane %v1394, 1
      %v1397 = vor.u32 %v1392, %v1396
      %v1399 = vshrl.u32 %v1376, 16
      %v1401 = vshll.u32 %v1376, 16
      %v1403 = vrot.slane %v1401, 1
      %v1404 = vor.u32 %v1399, %v1403
      %1405 = vrot.lane.b32.xlu0 %v1383, 4
      %v1406 = vpop.permute.xlu0 %1405
      %1407 = vrot.lane.b32.xlu0 %v1390, 4
      %v1408 = vpop.permute.xlu0 %1407
      %1409 = vrot.lane.b32.xlu0 %v1397, 4
      %v1410 = vpop.permute.xlu0 %1409
      %1411 = vrot.lane.b32.xlu0 %v1404, 4
      %v1412 = vpop.permute.xlu0 %1411
      %v1417 = vunpack.c.l.b16 %v1353
      %v1418 = vunpack.c.l.b16 %v1354
      %v1419 = vunpack.c.l.b16 %v1355
      %v1420 = vunpack.c.l.b16 %v1356
      %v1421 = vpack.c.b16 %v1366, %v1417
      %v1422 = vpack.c.b16 %v1368, %v1418
      %v1423 = vpack.c.b16 %v1370, %v1419
      %v1424 = vpack.c.b16 %v1372, %v1420
      %v1425 = vrot.slane %v1421, 1
      %v1426 = vrot.slane %v1422, 1
      %v1427 = vrot.slane %v1423, 1
      %v1428 = vrot.slane %v1424, 1
      %1429 = vrot.lane.b32.xlu0 %v1425, 8
      %v1430 = vpop.permute.xlu0 %1429
      %1431 = vrot.lane.b32.xlu0 %v1426, 8
      %v1432 = vpop.permute.xlu0 %1431
      %1433 = vrot.lane.b32.xlu0 %v1427, 8
      %v1434 = vpop.permute.xlu0 %1433
      %1435 = vrot.lane.b32.xlu0 %v1428, 8
      %v1436 = vpop.permute.xlu0 %1435
      %v1439 = vsel %vm1057, %v1345, %v1406
      %v1442 = vsel %vm1057, %v1346, %v1408
      %v1445 = vsel %vm1057, %v1347, %v1410
      %v1448 = vsel %vm1057, %v1348, %v1412
      %v1450 = vsel %vm1070, %v1439, %v1430
      %v1452 = vsel %vm1070, %v1442, %v1432
      %v1454 = vsel %vm1070, %v1445, %v1434
      %v1456 = vsel %vm1070, %v1448, %v1436
      %s1457 = scalar_lea.vmem %s6, 16
      %v1458 = vld [vmem:[%s1457] sm:$0xf]
      %v1459 = vld [vmem:[%s1457 + $0x4] sm:$0x3]
      %v1464 = vunpack.c.l.b16 %v1450
      %v1465 = vunpack.c.l.b16 %v1452
      %v1466 = vunpack.c.l.b16 %v1454
      %v1467 = vunpack.c.l.b16 %v1456
      %v1468 = vpack.c.b16 %v1465, %v1464
      %v1469 = vpack.c.b16 %v1467, %v1466
      %v1472 = vunpack.c.l.b16 %v1458
      %v1473 = vunpack.c.l.b16 %v1459
      %v1474 = vpack.c.b16 %v1473, %v1472
      %v1476 = vsel %vm1211, %v1468, 0
      %v1479 = vsel %vm1211, %v1469, 0
      %v1482 = vsel %vm1218, %v1474, 0
      %1484 = vmatprep.subr.bf16.mxu0 0
      %1485 = vmatpush1.bf16.msra.mxu0 %v1482
      %1486 = vmatprep.subr.bf16.mxu0 0
      %1487 = vmatpush1.bf16.msra.mxu0 0
      %1488 = vmatprep.subr.bf16.mxu0 0
      %1489 = vmatpush1.bf16.msra.mxu0 0
      %1490 = vmatprep.subr.bf16.mxu0 0
      %1491 = vmatpush1.bf16.msra.mxu0 0
      %1492 = vmatprep.subr.bf16.mxu0 0
      %1493 = vmatpush1.bf16.msra.mxu0 0
      %1494 = vmatprep.subr.bf16.mxu0 0
      %1495 = vmatpush1.bf16.msra.mxu0 0
      %1496 = vmatprep.subr.bf16.mxu0 0
      %1497 = vmatpush1.bf16.msra.mxu0 0
      %1498 = vmatprep.subr.bf16.mxu0 0
      %1499 = vmatpush1.bf16.msra.mxu0 0
      %1500 = vmatprep.subr.bf16.mxu0 0
      %1501 = vmatpush1.bf16.msra.mxu0 0
      %1502 = vmatprep.subr.bf16.mxu0 0
      %1503 = vmatpush1.bf16.msra.mxu0 0
      %1504 = vmatprep.subr.bf16.mxu0 0
      %1505 = vmatpush1.bf16.msra.mxu0 0
      %1506 = vmatprep.subr.bf16.mxu0 0
      %1507 = vmatpush1.bf16.msra.mxu0 0
      %1508 = vmatprep.subr.bf16.mxu0 0
      %1509 = vmatpush1.bf16.msra.mxu0 0
      %1510 = vmatprep.subr.bf16.mxu0 0
      %1511 = vmatpush1.bf16.msra.mxu0 0
      %1512 = vmatprep.subr.bf16.mxu0 0
      %1513 = vmatpush1.bf16.msra.mxu0 0
      %1514 = vmatprep.subr.bf16.mxu0 0
      %1515 = vmatpush1.bf16.msra.mxu0 0
      %1516 = vmatprep.mubr.bf16.mxu0 0
      %1517 = vmatmul.mubr.bf16.gmra.mrb[0].mxu0 %v1476
      %v1518 = vpop.f32.mrb[0].mxu0
      %v1519 = vadd.f32 0.0, %v1518
      %v1520 = vpop.f32.mrb[0].mxu0
      %v1521 = vpop.f32.mrb[0].mxu0
      %v1522 = vadd.f32 0.0, %v1521
      %v1523 = vpop.f32.mrb[0].mxu0
      %1524 = vmatprep.mubr.bf16.mxu0 0
      %1525 = vmatmul.mubr.bf16.gmra.mrb[0].mxu0 %v1479
      %v1526 = vpop.f32.mrb[0].mxu0
      %v1527 = vadd.f32 0.0, %v1526
      %v1528 = vpop.f32.mrb[0].mxu0
      %v1529 = vpop.f32.mrb[0].mxu0
      %v1530 = vadd.f32 0.0, %v1529
      %v1531 = vpop.f32.mrb[0].mxu0
      %1532 = vdwg.mxu0
      %v1533 = vadd.f32 %v1330, %v1519
      %v1534 = vadd.f32 %v1333, %v1522
      %v1535 = vadd.f32 %v1338, %v1527
      %v1536 = vadd.f32 %v1341, %v1530
      %v1538 = vlaneseq
      %v1539 = vshrl.u32 %v1538, 7
      %v1540 = vsub.s32 0, %v1539
      %v1541 = vrot.slane %v960, %v1540
      %v1543 = vmul.f32 %v1533, %v1541
      %v1544 = vmul.f32 %v1534, %v1541
      %v1545 = vmul.f32 %v1535, %v1541
      %v1546 = vmul.f32 %v1536, %v1541
      %v1548 = vlaneseq
      %v1549 = vshrl.u32 %v1548, 7
      %v1550 = vsub.s32 0, %v1549
      %v1551 = vrot.slane %v961, %v1550
      %v1553 = vadd.f32 %v1543, %v1551
      %v1554 = vadd.f32 %v1544, %v1551
      %v1555 = vadd.f32 %v1545, %v1551
      %v1556 = vadd.f32 %v1546, %v1551
      %v1557 = vmax.f32 %v1553, 0.0
      %v1558 = vmax.f32 %v1554, 0.0
      %v1559 = vmax.f32 %v1555, 0.0
      %v1560 = vmax.f32 %v1556, 0.0
      %v1561 = vpack.c.bf16 %v1558, %v1557
      %v1562 = vpack.c.bf16 %v1560, %v1559
      %v1564 = vsel %vm1057, %v1561, 0
      %v1567 = vsel %vm1057, %v1562, 0
      %vm1569 = vcmask 1041408
      %v1571 = vsel %vm1569, %v962, 0
      %1573 = vmatprep.subr.bf16.mxu0 0
      %1574 = vmatpush1.bf16.msra.mxu0 %v1571
      %1575 = vmatprep.subr.bf16.mxu0 0
      %1576 = vmatpush1.bf16.msra.mxu0 0
      %1577 = vmatprep.subr.bf16.mxu0 0
      %1578 = vmatpush1.bf16.msra.mxu0 0
      %1579 = vmatprep.subr.bf16.mxu0 0
      %1580 = vmatpush1.bf16.msra.mxu0 0
      %1581 = vmatprep.subr.bf16.mxu0 0
      %1582 = vmatpush1.bf16.msra.mxu0 0
      %1583 = vmatprep.subr.bf16.mxu0 0
      %1584 = vmatpush1.bf16.msra.mxu0 0
      %1585 = vmatprep.subr.bf16.mxu0 0
      %1586 = vmatpush1.bf16.msra.mxu0 0
      %1587 = vmatprep.subr.bf16.mxu0 0
      %1588 = vmatpush1.bf16.msra.mxu0 0
      %1589 = vmatprep.subr.bf16.mxu0 0
      %1590 = vmatpush1.bf16.msra.mxu0 0
      %1591 = vmatprep.subr.bf16.mxu0 0
      %1592 = vmatpush1.bf16.msra.mxu0 0
      %1593 = vmatprep.subr.bf16.mxu0 0
      %1594 = vmatpush1.bf16.msra.mxu0 0
      %1595 = vmatprep.subr.bf16.mxu0 0
      %1596 = vmatpush1.bf16.msra.mxu0 0
      %1597 = vmatprep.subr.bf16.mxu0 0
      %1598 = vmatpush1.bf16.msra.mxu0 0
      %1599 = vmatprep.subr.bf16.mxu0 0
      %1600 = vmatpush1.bf16.msra.mxu0 0
      %1601 = vmatprep.subr.bf16.mxu0 0
      %1602 = vmatpush1.bf16.msra.mxu0 0
      %1603 = vmatprep.subr.bf16.mxu0 0
      %1604 = vmatpush1.bf16.msra.mxu0 0
      %1605 = vmatprep.mubr.bf16.mxu0 0
      %1606 = vmatmul.mubr.bf16.gmra.mrb[0].mxu0 %v1564
      %v1607 = vpop.f32.mrb[0].mxu0
      %v1608 = vadd.f32 0.0, %v1607
      %v1609 = vpop.f32.mrb[0].mxu0
      %v1610 = vpop.f32.mrb[0].mxu0
      %v1611 = vadd.f32 0.0, %v1610
      %v1612 = vpop.f32.mrb[0].mxu0
      %1613 = vmatprep.mubr.bf16.mxu0 0
      %1614 = vmatmul.mubr.bf16.gmra.mrb[0].mxu0 %v1567
      %v1615 = vpop.f32.mrb[0].mxu0
      %v1616 = vadd.f32 0.0, %v1615
      %v1617 = vpop.f32.mrb[0].mxu0
      %v1618 = vpop.f32.mrb[0].mxu0
      %v1619 = vadd.f32 0.0, %v1618
      %v1620 = vpop.f32.mrb[0].mxu0
      %1621 = vdwg.mxu0
      %v1623 = vlaneseq
      %v1624 = vshrl.u32 %v1623, 7
      %v1625 = vsub.s32 0, %v1624
      %v1626 = vrot.slane %v963, %v1625
      %v1628 = vmul.f32 %v1608, %v1626
      %v1629 = vmul.f32 %v1611, %v1626
      %v1630 = vmul.f32 %v1616, %v1626
      %v1631 = vmul.f32 %v1619, %v1626
      %v1633 = vlaneseq
      %v1634 = vshrl.u32 %v1633, 7
      %v1635 = vsub.s32 0, %v1634
      %v1636 = vrot.slane %v964, %v1635
      %v1638 = vadd.f32 %v1628, %v1636
      %v1639 = vadd.f32 %v1629, %v1636
      %v1640 = vadd.f32 %v1630, %v1636
      %v1641 = vadd.f32 %v1631, %v1636
      %v1642 = vld [vmem:[%s527] sm:$0xf]
      %v1643 = vld [vmem:[%s527 + $0x4] sm:$0xf]
      %v1644 = vld [vmem:[%s527 + $0x8] sm:$0xf]
      %v1645 = vld [vmem:[%s527 + $0xc] sm:$0xf]
      %v1646 = vunpack.c.l.bf16 %v1642
      %v1647 = vunpack.c.l.bf16 %v1643
      %v1648 = vunpack.c.l.bf16 %v1644
      %v1649 = vunpack.c.l.bf16 %v1645
      %v1650 = vadd.f32 %v1638, %v1646
      %v1651 = vadd.f32 %v1639, %v1647
      %v1652 = vadd.f32 %v1640, %v1648
      %v1653 = vadd.f32 %v1641, %v1649
      %v1654 = vmax.f32 %v1650, 0.0
      %v1655 = vmax.f32 %v1651, 0.0
      %v1656 = vmax.f32 %v1652, 0.0
      %v1657 = vmax.f32 %v1653, 0.0
      %v1658 = vpack.c.bf16 %v1654, %v1654
      %v1659 = vpack.c.bf16 %v1655, %v1655
      %v1660 = vpack.c.bf16 %v1656, %v1656
      %v1661 = vpack.c.bf16 %v1657, %v1657
      %vm1662 = vcmask 125952
      %1663 = vst.msk [vmem:[%s569] sm:$0xf] %vm1662, %v1658
      %1664 = vst.msk [vmem:[%s569 + $0x4] sm:$0xf] %vm1662, %v1659
      %1665 = vst.msk [vmem:[%s569 + $0x8] sm:$0xf] %vm1662, %v1660
      %1666 = vst.msk [vmem:[%s569 + $0xc] sm:$0xf] %vm1662, %v1661
      %s1667 = smul.u32 4, %s28
      %p1668 = scmp.lt.s32.totalorder %s27, 1
      %s1669 = scalar_select %p1668, %s27, 1
      %p1670 = scmp.lt.s32.totalorder %s1667, 7
      %s1671 = scalar_select %p1670, %s1667, 7
      %s1672 = smul.addr %s1669, 8
      %s1673 = sadd.s32 %s1671, %s1672
      %s1674 = smul.addr %s1673, 4
      %s1675 = scalar_lea.vmem %s12, %s1674
      // Predicated region
      $region85: #{bottleneck_pallas.1} parent=67 // pred_check
        %p1676 = pneg %p344
      $region86: #{bottleneck_pallas.1} parent=67 // pred_check_branch
        %1678 = sbr.rel (%p1676) target = $region88
      $region87: #{bottleneck_pallas.1} parent=67 // pred_region
        %s1679 = smul.u32 4, %s28
      $region88: #{bottleneck_pallas.1} parent=67 // pred_fallthru
        _
    $region68: #{bottleneck_pallas.1} parent=5 // pred_fallthru
      _
    %p1680 = scmp.le.s32.totalorder 2, %s18
    // Predicated region
    $region89: #{bottleneck_pallas.1} parent=5 // pred_check
      %p1681 = pneg %p1680
    $region90: #{bottleneck_pallas.1} parent=5 // pred_check_branch
      %1683 = sbr.rel (%p1681) target = $region92
    $region91: #{bottleneck_pallas.1} parent=5 // pred_region
      %s1684 = ssub.s32 %s18, 2
      // Predicated region
      $region93: #{bottleneck_pallas.1} parent=91 // pred_check
        %p1685 = pneg %p350
      $region94: #{bottleneck_pallas.1} parent=91 // pred_check_branch
        %1687 = sbr.rel (%p1685) target = $region96
      $region95: #{bottleneck_pallas.1} parent=91 // pred_region
        %s1688 = smul.u32 4, %s30
        %p1689 = scmp.lt.s32.totalorder %s29, 1
        %s1690 = scalar_select %p1689, %s29, 1
        %p1691 = scmp.lt.s32.totalorder %s1688, 7
        %s1692 = scalar_select %p1691, %s1688, 7
        %s1693 = smul.addr %s1690, 8
        %s1694 = sadd.s32 %s1692, %s1693
        %s1695 = smul.addr %s1694, 4
        %s1696 = scalar_lea.vmem %s12, %s1695
      $region96: #{bottleneck_pallas.1} parent=91 // pred_fallthru
        _
    $region92: #{bottleneck_pallas.1} parent=5 // pred_fallthru
      _
  $region6: #{bottleneck_pallas.1} parent=0 // loop_footer
    %s22 = sadd.s32 1, %s18
  $region7: #{bottleneck_pallas.1} parent=0 // loop_footer_branch
    %17 = sbr.rel target = $region3
  $region8: #{bottleneck_pallas.1} parent=0 // loop_exit
    _

</llo_original>
